<compile_context>
chip_gen: v5e
topology: v5e:2x2
jax: 0.10.0
libtpu: 0.0.40
codegen_flags: <defaults>
</compile_context>

<pallas_src>
import functools

import numpy as np
import jax
import jax.numpy as jnp
from jax.experimental import pallas as pl
from jax.experimental.pallas import tpu as pltpu

NEG_SLOPE = 0.01               # torch.nn.LeakyReLU default negative slope
MXU_DT = jnp.bfloat16          # dtype of MXU matmul operands (f32 accumulate)
F32 = jnp.float32


def _leaky(y):
    return jnp.where(y > 0, y, NEG_SLOPE * y)


def _mxu(a, w):
    """MXU matmul: bf16 operands (cast once if needed), f32 accumulation."""
    if a.dtype != MXU_DT:
        a = a.astype(MXU_DT)
    return jnp.dot(a, w, preferred_element_type=jnp.float32)


def _full_spec(shape):
    nd = len(shape)
    return pl.BlockSpec(shape, lambda *_: (0,) * nd)


def _row_tile(m):
    """Row tile for mem-bound row kernels: as big as practical (<=1024)."""
    if m <= 1024:
        return m
    for cand in (1024, 512, 256):
        if m % cand == 0:
            return cand
    return 512            # Pallas masks the partial last block


def _split_tile(n, max_tile):
    """Largest multiple-of-8 divisor <= max_tile that yields >=2 grid steps."""
    cand = max_tile
    while cand >= 8:
        if n % cand == 0 and n // cand >= 2:
            return cand
        cand //= 2
    return n


# --------------------------------------------------------------------------- #
# Kernel 1: ConditionalBlock + encoder, grid over (t, b), output in GRU order
# --------------------------------------------------------------------------- #
def _cond_enc_kernel(x_ref, doy_ref, emb_ref,
                     w_in, b_in, w_ce, b_c, w_oi, b_oi, w_oc,
                     w_sk, b_sk, w_o, b_o, w_eh, b_e, o_ref):
    x = x_ref[0, 0]                                       # (N, F_in) f32
    xb = x.astype(MXU_DT)                                 # cast once (2 uses)
    doy = doy_ref[0, 0]                                   # (N, 1)
    hx = _leaky(_mxu(xb, w_in[...]) + b_in[...])
    # exog path folded: u = [doy/365, doy]  ->  doy * (w0/365 + w1)
    hu = _leaky(doy * w_ce[...] + b_c[...])
    h = _leaky(_mxu(hx, w_oi[...]) + b_oi[...] + _mxu(hu, w_oc[...]))
    h = h + _mxu(xb, w_sk[...]) + b_sk[...]               # skip connection
    h = _mxu(h, w_o[...]) + b_o[...]
    # encoder: Linear(cat[h, emb]) + LeakyReLU; emb @ W_e is precomputed (N,H)
    o_ref[0, 0] = _leaky(_mxu(h, w_eh[...]) + emb_ref[...] + b_e[...]
                         ).astype(o_ref.dtype)


def cond_enc(x, doy, pp):
    B, T, N, f_in = x.shape
    H = pp["hidden"]
    return pl.pallas_call(
        _cond_enc_kernel,
        out_shape=jax.ShapeDtypeStruct((T, B, N, H), jnp.float32),
        grid_spec=pltpu.PrefetchScalarGridSpec(
            num_scalar_prefetch=0,
            grid=(T, B),
            in_specs=[
                pl.BlockSpec((1, 1, N, f_in), lambda t, b: (b, t, 0, 0)),
                pl.BlockSpec((1, 1, N, 1), lambda t, b: (b, t, 0, 0)),
                _full_spec((N, H)),
                _full_spec((f_in, H)), _full_spec((1, H)),
                _full_spec((1, H)), _full_spec((1, H)),
                _full_spec((H, H)), _full_spec((1, H)),
                _full_spec((H, H)),
                _full_spec((f_in, H)), _full_spec((1, H)),
                _full_spec((H, H)), _full_spec((1, H)),
                _full_spec((H, H)), _full_spec((1, H)),
            ],
            out_specs=pl.BlockSpec((1, 1, N, H), lambda t, b: (t, b, 0, 0))),
        compiler_params=pltpu.CompilerParams(
            dimension_semantics=("parallel", "parallel")),
    )(x, doy, pp["emb_enc"],
      pp["cb_in_w"], pp["cb_in_b"], pp["cb_cond_weff"], pp["cb_cond_b"],
      pp["cb_outin_w"], pp["cb_outin_b"], pp["cb_outcond_w"],
      pp["cb_skip_w"], pp["cb_skip_b"], pp["cb_out_w"], pp["cb_out_b"],
      pp["enc_wh"], pp["enc_b"])


# --------------------------------------------------------------------------- #
# Kernel 2: fused multi-layer GRU; fused gate matmuls; BN parallel axis
# --------------------------------------------------------------------------- #
def _gru_kernel(x_ref, wi_ref, wh_ref, bi_ref, bh_ref, o_ref, h_sc,
                *, n_layers, H):
    t = pl.program_id(1)

    @pl.when(t == 0)
    def _():
        h_sc[...] = jnp.zeros_like(h_sc)

    inp = x_ref[0]                                        # (tile_bn, F) f32
    for l in range(n_layers):                             # stacked layers per step
        h = h_sc[l]
        # one (F,3H) and one (H,3H) matmul instead of 6 gate matmuls
        gi = _mxu(inp, wi_ref[l]) + bi_ref[l]             # (tile_bn, 3H)
        gh = _mxu(h, wh_ref[l]) + bh_ref[l]
        r = jax.nn.sigmoid(gi[:, :H] + gh[:, :H])
        z = jax.nn.sigmoid(gi[:, H:2 * H] + gh[:, H:2 * H])
        n = jnp.tanh(gi[:, 2 * H:] + r * gh[:, 2 * H:])
        h_new = (1.0 - z) * n + z * h
        h_sc[l] = h_new
        inp = h_new

    @pl.when(t == pl.num_programs(1) - 1)
    def _():
        o_ref[...] = inp.astype(o_ref.dtype)


def gru_stack(x_seq, pp, n_layers):
    T, BN, F = x_seq.shape
    H = pp["hidden"]
    L = n_layers
    tile_bn = _split_tile(BN, 256)
    return pl.pallas_call(
        functools.partial(_gru_kernel, n_layers=L, H=H),
        out_shape=jax.ShapeDtypeStruct((BN, H), jnp.float32),
        grid_spec=pltpu.PrefetchScalarGridSpec(
            num_scalar_prefetch=0,
            grid=(BN // tile_bn, T),
            in_specs=[pl.BlockSpec((1, tile_bn, F), lambda i, t: (t, i, 0)),
                      _full_spec((L, F, 3 * H)), _full_spec((L, H, 3 * H)),
                      _full_spec((L, 1, 3 * H)), _full_spec((L, 1, 3 * H))],
            out_specs=pl.BlockSpec((tile_bn, H), lambda i, t: (i, 0)),
            scratch_shapes=[pltpu.VMEM((L, tile_bn, H), jnp.float32)]),
        compiler_params=pltpu.CompilerParams(
            dimension_semantics=("parallel", "arbitrary")),
    )(x_seq.astype(jnp.float32),
      pp["gru_wi"], pp["gru_wh"], pp["gru_bi"], pp["gru_bh"])


# --------------------------------------------------------------------------- #
# Kernel 3a: per-layer PNA pre-compute  aj = z @ Wpj  (hoisted out of tiles)
# --------------------------------------------------------------------------- #
def _pna_pre_kernel(z_ref, wpj_ref, aj_ref, ajb_ref, aj2b_ref):
    aj = _mxu(z_ref[...], wpj_ref[...])                   # (tr, F) f32
    aj_ref[...] = aj
    ajb_ref[...] = aj.astype(MXU_DT)
    aj2b_ref[...] = (aj * aj).astype(MXU_DT)


def pna_pre(z, lp):
    Nn, F = z.shape
    tr = _row_tile(Nn)
    row = pl.BlockSpec((tr, F), lambda i: (i, 0))
    return pl.pallas_call(
        _pna_pre_kernel,
        out_shape=(jax.ShapeDtypeStruct((Nn, F), jnp.float32),
                   jax.ShapeDtypeStruct((Nn, F), MXU_DT),
                   jax.ShapeDtypeStruct((Nn, F), MXU_DT)),
        grid_spec=pltpu.PrefetchScalarGridSpec(
            num_scalar_prefetch=0,
            grid=(pl.cdiv(Nn, tr),),
            in_specs=[row, _full_spec((F, F))],
            out_specs=(row, row, row)),
        compiler_params=pltpu.CompilerParams(dimension_semantics=("parallel",)),
    )(z.astype(jnp.float32), lp["wpj"])


# --------------------------------------------------------------------------- #
# Kernel 3b: PNAConv main — row-tiled over destinations, chunked min/max
# --------------------------------------------------------------------------- #
def _pna_kernel(xt_ref, st_ref, a_ref, aj_ref, ajb_ref, aj2b_ref,
                wpi, bp, wx, wagg, bpost, wlin, blin, o_ref,
                *, chunk, apply_relu):
    xt = xt_ref[...]                              # (ti, F) destination rows
    xtb = xt.astype(MXU_DT)                       # cast once (2 matmul uses)
    A = a_ref[...]                                # (ti, Nn) bf16, A[i,j]=1 iff j->i
    st = st_ref[...]                              # (ti, 5) precomputed node stats
    deg, inv_deg, has = st[:, 0:1], st[:, 1:2], st[:, 2:3]
    amp, att = st[:, 3:4], st[:, 4:5]

    ai = _mxu(xtb, wpi[...]) + bp[...]            # (ti, F) pre_nn x_i part

    # mean / std via adjacency matmuls on the MXU (bf16 operands, f32 acc):
    #   sum_j m_ij   = deg*ai + A@aj
    #   sum_j m_ij^2 = deg*ai^2 + 2*ai*(A@aj) + A@(aj*aj)
    s1 = jnp.dot(A, ajb_ref[...], preferred_element_type=jnp.float32)
    s2 = jnp.dot(A, aj2b_ref[...], preferred_element_type=jnp.float32)
    mean = (deg * ai + s1) * inv_deg
    mean2 = (deg * ai * ai + 2.0 * ai * s1 + s2) * inv_deg
    var = mean2 - mean * mean
    std = jnp.sqrt(jnp.maximum(var, 0.0) + 1e-5)

    # min / max: chunked running reduce over source nodes — per-chunk temp is
    # only (ti, chunk, F), so no VMEM blow-up / spills.
    ti, F = xt.shape
    Nn = A.shape[1]
    BIG = jnp.float32(1e30)
    mmax_run = jnp.full((ti, F), -BIG, jnp.float32)
    mmin_run = jnp.full((ti, F), BIG, jnp.float32)
    for c0 in range(0, Nn, chunk):
        c1 = min(c0 + chunk, Nn)
        on = (A[:, c0:c1] > 0.5)[:, :, None]               # (ti, C, 1)
        ajc = aj_ref[c0:c1, :][None, :, :]                  # (1, C, F) f32
        mmax_run = jnp.maximum(mmax_run,
                               jnp.max(jnp.where(on, ajc, -BIG), axis=1))
        mmin_run = jnp.minimum(mmin_run,
                               jnp.min(jnp.where(on, ajc, BIG), axis=1))
    mmax = jnp.where(has > 0, ai + mmax_run, 0.0)
    mmin = jnp.where(has > 0, ai + mmin_run, 0.0)

    # post_nn + scalers without lane concatenation: the 13F-wide matmul is
    # distributed into per-aggregator / per-scaler (F,Fout) blocks; amp/att
    # are per-row scalars so  (scale*agg) @ W == scale * (agg @ W).
    acc = _mxu(xtb, wx[...]) + bpost[...]
    aggs = (mean, mmin, mmax, std)                          # PyG aggregator order
    for a in range(4):
        ab = aggs[a].astype(MXU_DT)
        acc = acc + _mxu(ab, wagg[0 * 4 + a])               # identity scaler
        acc = acc + amp * _mxu(ab, wagg[1 * 4 + a])         # amplification
        acc = acc + att * _mxu(ab, wagg[2 * 4 + a])         # attenuation

    out = _mxu(acc, wlin[...]) + blin[...]                  # conv.lin
    if apply_relu:                                          # BasicGNN inter-layer act
        out = jnp.maximum(out, 0.0)
    o_ref[...] = out.astype(o_ref.dtype)


def _pna_chunk(nn, ti, f):
    budget = 4 * 1024 * 1024                 # ~4 MiB masked-broadcast temp
    cap = max(8, budget // max(ti * f * 4, 1))
    for cand in (512, 256, 128, 64, 32, 16, 8):
        if cand <= cap and nn % cand == 0:
            return cand
    return min(nn, cap)


def pna_conv(z, adj_bf16, stats, lp, apply_relu):
    Nn, F = z.shape
    Fout = lp["wlin"].shape[1]
    aj, ajb, aj2b = pna_pre(z, lp)                  # hoisted per-layer pre_nn(x_j)
    ti = _split_tile(Nn, 128)                       # >=2 parallel steps (dual-TC)
    chunk = _pna_chunk(Nn, ti, F)
    row = lambda c: pl.BlockSpec((ti, c), lambda i: (i, 0))
    return pl.pallas_call(
        functools.partial(_pna_kernel, chunk=chunk, apply_relu=apply_relu),
        out_shape=jax.ShapeDtypeStruct((Nn, Fout), jnp.float32),
        grid_spec=pltpu.PrefetchScalarGridSpec(
            num_scalar_prefetch=0,
            grid=(pl.cdiv(Nn, ti),),
            in_specs=[
                row(F),                              # destination rows
                row(5),                              # precomputed node stats
                row(Nn),                             # adjacency rows (bf16)
                _full_spec((Nn, F)),                 # aj   (f32, min/max path)
                _full_spec((Nn, F)),                 # aj   (bf16, MXU)
                _full_spec((Nn, F)),                 # aj^2 (bf16, MXU)
                _full_spec((F, F)), _full_spec((1, F)),
                _full_spec((F, Fout)), _full_spec((12, F, Fout)),
                _full_spec((1, Fout)),
                _full_spec((Fout, Fout)), _full_spec((1, Fout)),
            ],
            out_specs=row(Fout)),
        compiler_params=pltpu.CompilerParams(dimension_semantics=("parallel",)),
    )(z.astype(jnp.float32), stats, adj_bf16, aj, ajb, aj2b,
      lp["wpi"], lp["bp"], lp["wx"], lp["wagg"], lp["bpost"],
      lp["wlin"], lp["blin"])


# --------------------------------------------------------------------------- #
# Kernel 4: residual + MLPDecoder (4 dense layers + readout, fused)
# --------------------------------------------------------------------------- #
def _decoder_kernel(z_ref, xt_ref, w0, b0, w1, b1, w2, b2, w3, b3, wro, bro,
                    o_ref):
    s = z_ref[...] + xt_ref[...]                          # residual add
    for w, b in ((w0, b0), (w1, b1), (w2, b2), (w3, b3)):
        s = _leaky(_mxu(s, w[...]) + b[...])
    o_ref[...] = (_mxu(s, wro[...]) + bro[...]).astype(o_ref.dtype)


def decoder(z, x_time, pp):
    M2, H = z.shape
    Hd = pp["dec_w0"].shape[1]
    n_out = pp["dec_ro_w"].shape[1]
    tm = _row_tile(M2)
    row = lambda c: pl.BlockSpec((tm, c), lambda i: (i, 0))
    return pl.pallas_call(
        _decoder_kernel,
        out_shape=jax.ShapeDtypeStruct((M2, n_out), jnp.float32),
        grid_spec=pltpu.PrefetchScalarGridSpec(
            num_scalar_prefetch=0,
            grid=(pl.cdiv(M2, tm),),
            in_specs=[row(H), row(H),
                      _full_spec((H, Hd)), _full_spec((1, Hd)),
                      _full_spec((Hd, Hd)), _full_spec((1, Hd)),
                      _full_spec((Hd, Hd)), _full_spec((1, Hd)),
                      _full_spec((Hd, Hd)), _full_spec((1, Hd)),
                      _full_spec((Hd, n_out)), _full_spec((1, n_out))],
            out_specs=row(n_out)),
        compiler_params=pltpu.CompilerParams(dimension_semantics=("parallel",)),
    )(z, x_time,
      pp["dec_w0"], pp["dec_b0"], pp["dec_w1"], pp["dec_b1"],
      pp["dec_w2"], pp["dec_b2"], pp["dec_w3"], pp["dec_b3"],
      pp["dec_ro_w"], pp["dec_ro_b"])


# --------------------------------------------------------------------------- #
# TPNA forward (glue in plain JAX, hot paths in the fused Pallas kernels)
# --------------------------------------------------------------------------- #
def tpna_forward(pp, x, exog, adj, avg_log, *, horizon, out_features,
                 n_rnn_layers, n_pna_layers):
    b, t, n, f_in = x.shape
    H = pp["hidden"]

    # scale_day_of_year is folded into the conditional block (prepare_params)
    doy = exog[..., 1:2].astype(jnp.float32)               # (b,t,n,1)

    # ---- ConditionalBlock + encoder, output written directly in (T, B*N, H)
    h_seq = cond_enc(x.astype(jnp.float32), doy, pp)        # (t, b, n, H)
    seq = h_seq.reshape(t, b * n, H)                        # free reshape

    # ---- stacked GRU over time; only last hidden state kept
    x_time = gru_stack(seq, pp, n_rnn_layers)               # (b*n, H)

    # ---- adjacency-derived per-node stats: once per call, exact divisions
    A32 = adj.astype(jnp.float32)
    deg = jnp.sum(A32, axis=1, keepdims=True)               # in-degree
    degc = jnp.maximum(deg, 1.0)
    logd = jnp.log(degc + 1.0)
    stats = jnp.concatenate(
        [deg, 1.0 / degc, (deg > 0).astype(jnp.float32),
         logd / avg_log, avg_log / logd], axis=1)           # (Nn, 5)
    adj_bf16 = adj.astype(jnp.bfloat16)                     # exact for 0/1 entries

    # ---- PNA GNN on flattened '(b n)' nodes; ReLU between layers only
    z = x_time
    for l in range(n_pna_layers):
        z = pna_conv(z, adj_bf16, stats, pp["pna"][l],
                     apply_relu=(l < n_pna_layers - 1))

    # ---- residual + MLPDecoder (receptive_field=1 -> single step), fused
    s = decoder(z, x_time, pp)                               # (b*n, horizon*out)
    return s.reshape(b, n, horizon, out_features).transpose(0, 2, 1, 3)


# --------------------------------------------------------------------------- #
# Parameter init (PyTorch layout) and one-time conversion to kernel layout
# --------------------------------------------------------------------------- #
def _linear_params(key, out_f, in_f, bias=True):
    k1, k2 = jax.random.split(key)
    bound = 1.0 / np.sqrt(in_f)
    w = jax.random.uniform(k1, (out_f, in_f), jnp.float32, -bound, bound)
    if bias:
        b = jax.random.uniform(k2, (out_f,), jnp.float32, -bound, bound)
        return w, b
    return w, None


def init_params(key, *, n_nodes, input_size, hidden, out_features, horizon,
                n_rnn_layers, n_pna_layers, exog_size=2):
    keys = iter(jax.random.split(key, 64))
    p = {}
    p["cb_in_w"], p["cb_in_b"] = _linear_params(next(keys), hidden, input_size)
    p["cb_cond_w"], p["cb_cond_b"] = _linear_params(next(keys), hidden, exog_size)
    p["cb_outin_w"], p["cb_outin_b"] = _linear_params(next(keys), hidden, hidden)
    p["cb_outcond_w"], _ = _linear_params(next(keys), hidden, hidden, bias=False)
    p["cb_skip_w"], p["cb_skip_b"] = _linear_params(next(keys), hidden, input_size)
    p["cb_out_w"], p["cb_out_b"] = _linear_params(next(keys), hidden, hidden)
    p["node_emb"] = jax.random.normal(next(keys), (n_nodes, hidden), jnp.float32) * 0.1
    p["enc_w"], p["enc_b"] = _linear_params(next(keys), hidden, hidden * 2)
    for l in range(n_rnn_layers):
        p[f"gru_wih_{l}"], p[f"gru_bih_{l}"] = _linear_params(next(keys), 3 * hidden, hidden)
        p[f"gru_whh_{l}"], p[f"gru_bhh_{l}"] = _linear_params(next(keys), 3 * hidden, hidden)
    pna = []
    for l in range(n_pna_layers):
        lp = {}
        lp["pre_w"], lp["pre_b"] = _linear_params(next(keys), hidden, 2 * hidden)
        lp["post_w"], lp["post_b"] = _linear_params(next(keys), hidden, 13 * hidden)
        lp["lin_w"], lp["lin_b"] = _linear_params(next(keys), hidden, hidden)
        pna.append(lp)
    p["pna"] = pna
    dec_in = hidden
    for i in range(4):
        p[f"dec_w{i}"], p[f"dec_b{i}"] = _linear_params(next(keys), 2 * hidden, dec_in)
        dec_in = 2 * hidden
    p["dec_ro_w"], p["dec_ro_b"] = _linear_params(next(keys), out_features * horizon, 2 * hidden)
    return p


def prepare_params(p, *, n_rnn_layers, n_pna_layers):
    """One-time conversion: transpose to (in,out), cast MXU operands to bf16,
    fuse GRU gate weights, split PNA post_nn weights per aggregator/scaler,
    fold exog conditioning, precompute the node-embedding encoder term."""
    f32 = jnp.float32
    tw = lambda w: jnp.asarray(w, f32).T.astype(MXU_DT)
    rb = lambda b: jnp.asarray(b, f32).reshape(1, -1)
    H = p["cb_in_w"].shape[0]
    pp = {"hidden": H}

    pp["cb_in_w"], pp["cb_in_b"] = tw(p["cb_in_w"]), rb(p["cb_in_b"])
    wc = jnp.asarray(p["cb_cond_w"], f32)                     # (H, 2); u = [doy/365, doy]
    pp["cb_cond_weff"] = (wc[:, 0] / 365.0 + wc[:, 1]).reshape(1, H)
    pp["cb_cond_b"] = rb(p["cb_cond_b"])
    pp["cb_outin_w"], pp["cb_outin_b"] = tw(p["cb_outin_w"]), rb(p["cb_outin_b"])
    pp["cb_outcond_w"] = tw(p["cb_outcond_w"])
    pp["cb_skip_w"], pp["cb_skip_b"] = tw(p["cb_skip_w"]), rb(p["cb_skip_b"])
    pp["cb_out_w"], pp["cb_out_b"] = tw(p["cb_out_w"]), rb(p["cb_out_b"])

    enc_w = jnp.asarray(p["enc_w"], f32)                      # (H, 2H): [h | emb]
    pp["enc_wh"] = enc_w[:, :H].T.astype(MXU_DT)
    pp["enc_b"] = rb(p["enc_b"])
    pp["emb_enc"] = jnp.asarray(p["node_emb"], f32) @ enc_w[:, H:].T    # (n, H)

    wi_l, wh_l, bi_l, bh_l = [], [], [], []
    for l in range(n_rnn_layers):
        wih = jnp.asarray(p[f"gru_wih_{l}"], f32)              # (3H, H), gates r|z|n
        whh = jnp.asarray(p[f"gru_whh_{l}"], f32)
        wi_l.append(wih.T)                                     # (H, 3H) fused gates
        wh_l.append(whh.T)
        bi_l.append(jnp.asarray(p[f"gru_bih_{l}"], f32).reshape(1, 3 * H))
        bh_l.append(jnp.asarray(p[f"gru_bhh_{l}"], f32).reshape(1, 3 * H))
    pp["gru_wi"] = jnp.stack(wi_l).astype(MXU_DT)              # (L, H, 3H)
    pp["gru_wh"] = jnp.stack(wh_l).astype(MXU_DT)
    pp["gru_bi"] = jnp.stack(bi_l)                             # (L, 1, 3H)
    pp["gru_bh"] = jnp.stack(bh_l)

    pna = []
    for l in range(n_pna_layers):
        lp = p["pna"][l]
        wpre = jnp.asarray(lp["pre_w"], f32)                   # (F, 2F): [x_i | x_j]
        F = wpre.shape[0]
        wpostT = jnp.asarray(lp["post_w"], f32).T              # (13F, Fout)
        # post_nn input order: [x | (mean,min,max,std) x (id, amp, att)]
        wagg = jnp.stack([wpostT[F + k * F: F + (k + 1) * F] for k in range(12)])
        pna.append({
            "wpi": wpre[:, :F].T.astype(MXU_DT),
            "wpj": wpre[:, F:].T.astype(MXU_DT),
            "bp": rb(lp["pre_b"]),
            "wx": wpostT[:F].astype(MXU_DT),                   # (F, Fout)
            "wagg": wagg.astype(MXU_DT),                       # (12, F, Fout)
            "bpost": rb(lp["post_b"]),
            "wlin": tw(lp["lin_w"]), "blin": rb(lp["lin_b"]),
        })
    pp["pna"] = pna

    for i in range(4):
        pp[f"dec_w{i}"], pp[f"dec_b{i}"] = tw(p[f"dec_w{i}"]), rb(p[f"dec_b{i}"])
    pp["dec_ro_w"], pp["dec_ro_b"] = tw(p["dec_ro_w"]), rb(p["dec_ro_b"])
    return pp


# --------------------------------------------------------------------------- #
if __name__ == "__main__":
    B, T, N = 2, 4, 8
    F_IN, HID, F_OUT, HOR = 8, 32, 8, 2
    L_RNN, L_PNA = 2, 2

    key = jax.random.PRNGKey(0)
    kp, kx, ke = jax.random.split(key, 3)
    params = init_params(kp, n_nodes=N, input_size=F_IN, hidden=HID,
                         out_features=F_OUT, horizon=HOR,
                         n_rnn_layers=L_RNN, n_pna_layers=L_PNA)
    pp = prepare_params(params, n_rnn_layers=L_RNN, n_pna_layers=L_PNA)

    x = jax.random.normal(kx, (B, T, N, F_IN), jnp.float32)
    day = jax.random.randint(ke, (B, T, N, 1), 1, 366).astype(jnp.float32)
    exog = jnp.concatenate([jnp.zeros_like(day), day], axis=-1)   # channel 1 = day-of-year

    # Bidirectional ring graph per batch sample, block-diagonal over '(b n)' nodes.
    A = np.zeros((B * N, B * N), np.float32)
    for bb in range(B):
        off = bb * N
        for i in range(N):
            A[off + i, off + (i + 1) % N] = 1.0    # edge (i+1) -> i
            A[off + i, off + (i - 1) % N] = 1.0    # edge (i-1) -> i
    in_deg = A.sum(axis=1)
    avg_log = float(np.mean(np.log(in_deg + 1.0)))  # PNA avg_deg['log']

    out = tpna_forward(pp, x, exog, jnp.asarray(A), avg_log,
                       horizon=HOR, out_features=F_OUT,
                       n_rnn_layers=L_RNN, n_pna_layers=L_PNA)
    out = jax.block_until_ready(out)

    assert out.shape == (B, HOR, N, F_OUT), out.shape
    assert np.all(np.isfinite(np.asarray(out)))
    print("KERNEL_OK")
</pallas_src>

<mosaic_0001>
module attributes {stable_mosaic.version = 11 : i64} {
  func.func @_cond_enc_kernel(%arg0: i32, %arg1: i32, %arg2: memref<1x1x8x8xf32, #tpu.memory_space<vmem>>, %arg3: memref<1x1x8x1xf32, #tpu.memory_space<vmem>>, %arg4: memref<8x32xf32, #tpu.memory_space<vmem>>, %arg5: memref<8x32xbf16, #tpu.memory_space<vmem>>, %arg6: memref<1x32xf32, #tpu.memory_space<vmem>>, %arg7: memref<1x32xf32, #tpu.memory_space<vmem>>, %arg8: memref<1x32xf32, #tpu.memory_space<vmem>>, %arg9: memref<32x32xbf16, #tpu.memory_space<vmem>>, %arg10: memref<1x32xf32, #tpu.memory_space<vmem>>, %arg11: memref<32x32xbf16, #tpu.memory_space<vmem>>, %arg12: memref<8x32xbf16, #tpu.memory_space<vmem>>, %arg13: memref<1x32xf32, #tpu.memory_space<vmem>>, %arg14: memref<32x32xbf16, #tpu.memory_space<vmem>>, %arg15: memref<1x32xf32, #tpu.memory_space<vmem>>, %arg16: memref<32x32xbf16, #tpu.memory_space<vmem>>, %arg17: memref<1x32xf32, #tpu.memory_space<vmem>>, %arg18: memref<1x1x8x32xf32, #tpu.memory_space<vmem>>) attributes {dimension_semantics = [#tpu.dimension_semantics<parallel>, #tpu.dimension_semantics<parallel>], iteration_bounds = array<i64: 4, 2>, scalar_prefetch = 0 : i64, scratch_operands = 0 : i64, tpu.core_type = #tpu.core_type<tc>, window_params = [{transform_indices = @transform_0, window_bounds = array<i64: 1, 1, 8, 8>}, {transform_indices = @transform_1, window_bounds = array<i64: 1, 1, 8, 1>}, {pipeline_mode = #tpu.pipeline_mode<synchronous>, transform_indices = @transform_2, window_bounds = array<i64: 8, 32>}, {pipeline_mode = #tpu.pipeline_mode<synchronous>, transform_indices = @transform_3, window_bounds = array<i64: 8, 32>}, {pipeline_mode = #tpu.pipeline_mode<synchronous>, transform_indices = @transform_4, window_bounds = array<i64: 1, 32>}, {pipeline_mode = #tpu.pipeline_mode<synchronous>, transform_indices = @transform_5, window_bounds = array<i64: 1, 32>}, {pipeline_mode = #tpu.pipeline_mode<synchronous>, transform_indices = @transform_6, window_bounds = array<i64: 1, 32>}, {pipeline_mode = #tpu.pipeline_mode<synchronous>, transform_indices = @transform_7, window_bounds = array<i64: 32, 32>}, {pipeline_mode = #tpu.pipeline_mode<synchronous>, transform_indices = @transform_8, window_bounds = array<i64: 1, 32>}, {pipeline_mode = #tpu.pipeline_mode<synchronous>, transform_indices = @transform_9, window_bounds = array<i64: 32, 32>}, {pipeline_mode = #tpu.pipeline_mode<synchronous>, transform_indices = @transform_10, window_bounds = array<i64: 8, 32>}, {pipeline_mode = #tpu.pipeline_mode<synchronous>, transform_indices = @transform_11, window_bounds = array<i64: 1, 32>}, {pipeline_mode = #tpu.pipeline_mode<synchronous>, transform_indices = @transform_12, window_bounds = array<i64: 32, 32>}, {pipeline_mode = #tpu.pipeline_mode<synchronous>, transform_indices = @transform_13, window_bounds = array<i64: 1, 32>}, {pipeline_mode = #tpu.pipeline_mode<synchronous>, transform_indices = @transform_14, window_bounds = array<i64: 32, 32>}, {pipeline_mode = #tpu.pipeline_mode<synchronous>, transform_indices = @transform_15, window_bounds = array<i64: 1, 32>}, {transform_indices = @transform_16, window_bounds = array<i64: 1, 1, 8, 32>}]} {
    %c0 = arith.constant 0 : index
    %c0_0 = arith.constant 0 : index
    %c0_1 = arith.constant 0 : index
    %c0_2 = arith.constant 0 : index
    %0 = vector.load %arg2[%c0, %c0_0, %c0_1, %c0_2] : memref<1x1x8x8xf32, #tpu.memory_space<vmem>>, vector<1x1x8x8xf32>
    %1 = vector.shape_cast %0 : vector<1x1x8x8xf32> to vector<8x8xf32>
    %2 = arith.truncf %1 : vector<8x8xf32> to vector<8x8xbf16>
    %c0_3 = arith.constant 0 : index
    %c0_4 = arith.constant 0 : index
    %c0_5 = arith.constant 0 : index
    %c0_6 = arith.constant 0 : index
    %3 = vector.load %arg3[%c0_3, %c0_4, %c0_5, %c0_6] : memref<1x1x8x1xf32, #tpu.memory_space<vmem>>, vector<1x1x8x1xf32>
    %4 = vector.shape_cast %3 : vector<1x1x8x1xf32> to vector<8x1xf32>
    %c0_7 = arith.constant 0 : index
    %c0_8 = arith.constant 0 : index
    %5 = vector.load %arg5[%c0_7, %c0_8] : memref<8x32xbf16, #tpu.memory_space<vmem>>, vector<8x32xbf16>
    %cst = arith.constant dense<0.000000e+00> : vector<8x32xf32>
    %6 = tpu.matmul %2, %5, %cst {dimension_numbers = #tpu.dot_dimension_numbers<[1], [0], [0], [1], [0, 0, 1, 1], [], []>} : vector<8x8xbf16>, vector<8x32xbf16>, vector<8x32xf32> -> vector<8x32xf32>
    %c0_9 = arith.constant 0 : index
    %c0_10 = arith.constant 0 : index
    %7 = vector.load %arg6[%c0_9, %c0_10] : memref<1x32xf32, #tpu.memory_space<vmem>>, vector<1x32xf32>
    %8 = vector.broadcast %7 : vector<1x32xf32> to vector<8x32xf32>
    %9 = arith.addf %6, %8 : vector<8x32xf32>
    %cst_11 = arith.constant 0.000000e+00 : f32
    %10 = vector.broadcast %cst_11 : f32 to vector<8x32xf32>
    %11 = arith.cmpf ogt, %9, %10 : vector<8x32xf32>
    %cst_12 = arith.constant 0.00999999977 : f32
    %12 = vector.broadcast %cst_12 : f32 to vector<8x32xf32>
    %13 = arith.mulf %12, %9 : vector<8x32xf32>
    %14 = arith.select %11, %9, %13 : vector<8x32xi1>, vector<8x32xf32>
    %c0_13 = arith.constant 0 : index
    %c0_14 = arith.constant 0 : index
    %15 = vector.load %arg7[%c0_13, %c0_14] : memref<1x32xf32, #tpu.memory_space<vmem>>, vector<1x32xf32>
    %16 = vector.broadcast %4 : vector<8x1xf32> to vector<8x32xf32>
    %17 = vector.broadcast %15 : vector<1x32xf32> to vector<8x32xf32>
    %18 = arith.mulf %16, %17 : vector<8x32xf32>
    %c0_15 = arith.constant 0 : index
    %c0_16 = arith.constant 0 : index
    %19 = vector.load %arg8[%c0_15, %c0_16] : memref<1x32xf32, #tpu.memory_space<vmem>>, vector<1x32xf32>
    %20 = vector.broadcast %19 : vector<1x32xf32> to vector<8x32xf32>
    %21 = arith.addf %18, %20 : vector<8x32xf32>
    %cst_17 = arith.constant 0.000000e+00 : f32
    %22 = vector.broadcast %cst_17 : f32 to vector<8x32xf32>
    %23 = arith.cmpf ogt, %21, %22 : vector<8x32xf32>
    %cst_18 = arith.constant 0.00999999977 : f32
    %24 = vector.broadcast %cst_18 : f32 to vector<8x32xf32>
    %25 = arith.mulf %24, %21 : vector<8x32xf32>
    %26 = arith.select %23, %21, %25 : vector<8x32xi1>, vector<8x32xf32>
    %c0_19 = arith.constant 0 : index
    %c0_20 = arith.constant 0 : index
    %27 = vector.load %arg9[%c0_19, %c0_20] : memref<32x32xbf16, #tpu.memory_space<vmem>>, vector<32x32xbf16>
    %28 = arith.truncf %14 : vector<8x32xf32> to vector<8x32xbf16>
    %cst_21 = arith.constant dense<0.000000e+00> : vector<8x32xf32>
    %29 = tpu.matmul %28, %27, %cst_21 {dimension_numbers = #tpu.dot_dimension_numbers<[1], [0], [0], [1], [0, 0, 1, 1], [], []>} : vector<8x32xbf16>, vector<32x32xbf16>, vector<8x32xf32> -> vector<8x32xf32>
    %c0_22 = arith.constant 0 : index
    %c0_23 = arith.constant 0 : index
    %30 = vector.load %arg10[%c0_22, %c0_23] : memref<1x32xf32, #tpu.memory_space<vmem>>, vector<1x32xf32>
    %31 = vector.broadcast %30 : vector<1x32xf32> to vector<8x32xf32>
    %32 = arith.addf %29, %31 : vector<8x32xf32>
    %c0_24 = arith.constant 0 : index
    %c0_25 = arith.constant 0 : index
    %33 = vector.load %arg11[%c0_24, %c0_25] : memref<32x32xbf16, #tpu.memory_space<vmem>>, vector<32x32xbf16>
    %34 = arith.truncf %26 : vector<8x32xf32> to vector<8x32xbf16>
    %cst_26 = arith.constant dense<0.000000e+00> : vector<8x32xf32>
    %35 = tpu.matmul %34, %33, %cst_26 {dimension_numbers = #tpu.dot_dimension_numbers<[1], [0], [0], [1], [0, 0, 1, 1], [], []>} : vector<8x32xbf16>, vector<32x32xbf16>, vector<8x32xf32> -> vector<8x32xf32>
    %36 = arith.addf %32, %35 : vector<8x32xf32>
    %cst_27 = arith.constant 0.000000e+00 : f32
    %37 = vector.broadcast %cst_27 : f32 to vector<8x32xf32>
    %38 = arith.cmpf ogt, %36, %37 : vector<8x32xf32>
    %cst_28 = arith.constant 0.00999999977 : f32
    %39 = vector.broadcast %cst_28 : f32 to vector<8x32xf32>
    %40 = arith.mulf %39, %36 : vector<8x32xf32>
    %41 = arith.select %38, %36, %40 : vector<8x32xi1>, vector<8x32xf32>
    %c0_29 = arith.constant 0 : index
    %c0_30 = arith.constant 0 : index
    %42 = vector.load %arg12[%c0_29, %c0_30] : memref<8x32xbf16, #tpu.memory_space<vmem>>, vector<8x32xbf16>
    %cst_31 = arith.constant dense<0.000000e+00> : vector<8x32xf32>
    %43 = tpu.matmul %2, %42, %cst_31 {dimension_numbers = #tpu.dot_dimension_numbers<[1], [0], [0], [1], [0, 0, 1, 1], [], []>} : vector<8x8xbf16>, vector<8x32xbf16>, vector<8x32xf32> -> vector<8x32xf32>
    %44 = arith.addf %41, %43 : vector<8x32xf32>
    %c0_32 = arith.constant 0 : index
    %c0_33 = arith.constant 0 : index
    %45 = vector.load %arg13[%c0_32, %c0_33] : memref<1x32xf32, #tpu.memory_space<vmem>>, vector<1x32xf32>
    %46 = vector.broadcast %45 : vector<1x32xf32> to vector<8x32xf32>
    %47 = arith.addf %44, %46 : vector<8x32xf32>
    %c0_34 = arith.constant 0 : index
    %c0_35 = arith.constant 0 : index
    %48 = vector.load %arg14[%c0_34, %c0_35] : memref<32x32xbf16, #tpu.memory_space<vmem>>, vector<32x32xbf16>
    %49 = arith.truncf %47 : vector<8x32xf32> to vector<8x32xbf16>
    %cst_36 = arith.constant dense<0.000000e+00> : vector<8x32xf32>
    %50 = tpu.matmul %49, %48, %cst_36 {dimension_numbers = #tpu.dot_dimension_numbers<[1], [0], [0], [1], [0, 0, 1, 1], [], []>} : vector<8x32xbf16>, vector<32x32xbf16>, vector<8x32xf32> -> vector<8x32xf32>
    %c0_37 = arith.constant 0 : index
    %c0_38 = arith.constant 0 : index
    %51 = vector.load %arg15[%c0_37, %c0_38] : memref<1x32xf32, #tpu.memory_space<vmem>>, vector<1x32xf32>
    %52 = vector.broadcast %51 : vector<1x32xf32> to vector<8x32xf32>
    %53 = arith.addf %50, %52 : vector<8x32xf32>
    %c0_39 = arith.constant 0 : index
    %c0_40 = arith.constant 0 : index
    %54 = vector.load %arg16[%c0_39, %c0_40] : memref<32x32xbf16, #tpu.memory_space<vmem>>, vector<32x32xbf16>
    %55 = arith.truncf %53 : vector<8x32xf32> to vector<8x32xbf16>
    %cst_41 = arith.constant dense<0.000000e+00> : vector<8x32xf32>
    %56 = tpu.matmul %55, %54, %cst_41 {dimension_numbers = #tpu.dot_dimension_numbers<[1], [0], [0], [1], [0, 0, 1, 1], [], []>} : vector<8x32xbf16>, vector<32x32xbf16>, vector<8x32xf32> -> vector<8x32xf32>
    %c0_42 = arith.constant 0 : index
    %c0_43 = arith.constant 0 : index
    %57 = vector.load %arg4[%c0_42, %c0_43] : memref<8x32xf32, #tpu.memory_space<vmem>>, vector<8x32xf32>
    %58 = arith.addf %56, %57 : vector<8x32xf32>
    %c0_44 = arith.constant 0 : index
    %c0_45 = arith.constant 0 : index
    %59 = vector.load %arg17[%c0_44, %c0_45] : memref<1x32xf32, #tpu.memory_space<vmem>>, vector<1x32xf32>
    %60 = vector.broadcast %59 : vector<1x32xf32> to vector<8x32xf32>
    %61 = arith.addf %58, %60 : vector<8x32xf32>
    %cst_46 = arith.constant 0.000000e+00 : f32
    %62 = vector.broadcast %cst_46 : f32 to vector<8x32xf32>
    %63 = arith.cmpf ogt, %61, %62 : vector<8x32xf32>
    %cst_47 = arith.constant 0.00999999977 : f32
    %64 = vector.broadcast %cst_47 : f32 to vector<8x32xf32>
    %65 = arith.mulf %64, %61 : vector<8x32xf32>
    %66 = arith.select %63, %61, %65 : vector<8x32xi1>, vector<8x32xf32>
    %c0_48 = arith.constant 0 : index
    %c0_49 = arith.constant 0 : index
    %c0_50 = arith.constant 0 : index
    %c0_51 = arith.constant 0 : index
    %67 = vector.load %arg18[%c0_48, %c0_49, %c0_50, %c0_51] : memref<1x1x8x32xf32, #tpu.memory_space<vmem>>, vector<1x1x8x32xf32>
    %68 = vector.shape_cast %67 : vector<1x1x8x32xf32> to vector<8x32xf32>
    %69 = vector.shape_cast %66 : vector<8x32xf32> to vector<1x1x8x32xf32>
    tpu.vector_store %arg18[%c0_48, %c0_49, %c0_50, %c0_51], %69 {strides = array<i32>} : memref<1x1x8x32xf32, #tpu.memory_space<vmem>>, vector<1x1x8x32xf32>,
    return
  }
  func.func @transform_0(%arg0: i32, %arg1: i32) -> (i32, i32, i32, i32) {
    %c0_i32 = arith.constant 0 : i32
    %c0_i32_0 = arith.constant 0 : i32
    %c0_i32_1 = arith.constant 0 : i32
    return %arg1, %arg0, %c0_i32, %c0_i32_0 : i32, i32, i32, i32
  }
  func.func @transform_1(%arg0: i32, %arg1: i32) -> (i32, i32, i32, i32) {
    %c0_i32 = arith.constant 0 : i32
    %c0_i32_0 = arith.constant 0 : i32
    %c0_i32_1 = arith.constant 0 : i32
    return %arg1, %arg0, %c0_i32, %c0_i32_0 : i32, i32, i32, i32
  }
  func.func @transform_2(%arg0: i32, %arg1: i32) -> (i32, i32) {
    %c0_i32 = arith.constant 0 : i32
    %c0_i32_0 = arith.constant 0 : i32
    %c0_i32_1 = arith.constant 0 : i32
    return %c0_i32, %c0_i32_0 : i32, i32
  }
  func.func @transform_3(%arg0: i32, %arg1: i32) -> (i32, i32) {
    %c0_i32 = arith.constant 0 : i32
    %c0_i32_0 = arith.constant 0 : i32
    %c0_i32_1 = arith.constant 0 : i32
    return %c0_i32, %c0_i32_0 : i32, i32
  }
  func.func @transform_4(%arg0: i32, %arg1: i32) -> (i32, i32) {
    %c0_i32 = arith.constant 0 : i32
    %c0_i32_0 = arith.constant 0 : i32
    %c0_i32_1 = arith.constant 0 : i32
    return %c0_i32, %c0_i32_0 : i32, i32
  }
  func.func @transform_5(%arg0: i32, %arg1: i32) -> (i32, i32) {
    %c0_i32 = arith.constant 0 : i32
    %c0_i32_0 = arith.constant 0 : i32
    %c0_i32_1 = arith.constant 0 : i32
    return %c0_i32, %c0_i32_0 : i32, i32
  }
  func.func @transform_6(%arg0: i32, %arg1: i32) -> (i32, i32) {
    %c0_i32 = arith.constant 0 : i32
    %c0_i32_0 = arith.constant 0 : i32
    %c0_i32_1 = arith.constant 0 : i32
    return %c0_i32, %c0_i32_0 : i32, i32
  }
  func.func @transform_7(%arg0: i32, %arg1: i32) -> (i32, i32) {
    %c0_i32 = arith.constant 0 : i32
    %c0_i32_0 = arith.constant 0 : i32
    %c0_i32_1 = arith.constant 0 : i32
    return %c0_i32, %c0_i32_0 : i32, i32
  }
  func.func @transform_8(%arg0: i32, %arg1: i32) -> (i32, i32) {
    %c0_i32 = arith.constant 0 : i32
    %c0_i32_0 = arith.constant 0 : i32
    %c0_i32_1 = arith.constant 0 : i32
    return %c0_i32, %c0_i32_0 : i32, i32
  }
  func.func @transform_9(%arg0: i32, %arg1: i32) -> (i32, i32) {
    %c0_i32 = arith.constant 0 : i32
    %c0_i32_0 = arith.constant 0 : i32
    %c0_i32_1 = arith.constant 0 : i32
    return %c0_i32, %c0_i32_0 : i32, i32
  }
  func.func @transform_10(%arg0: i32, %arg1: i32) -> (i32, i32) {
    %c0_i32 = arith.constant 0 : i32
    %c0_i32_0 = arith.constant 0 : i32
    %c0_i32_1 = arith.constant 0 : i32
    return %c0_i32, %c0_i32_0 : i32, i32
  }
  func.func @transform_11(%arg0: i32, %arg1: i32) -> (i32, i32) {
    %c0_i32 = arith.constant 0 : i32
    %c0_i32_0 = arith.constant 0 : i32
    %c0_i32_1 = arith.constant 0 : i32
    return %c0_i32, %c0_i32_0 : i32, i32
  }
  func.func @transform_12(%arg0: i32, %arg1: i32) -> (i32, i32) {
    %c0_i32 = arith.constant 0 : i32
    %c0_i32_0 = arith.constant 0 : i32
    %c0_i32_1 = arith.constant 0 : i32
    return %c0_i32, %c0_i32_0 : i32, i32
  }
  func.func @transform_13(%arg0: i32, %arg1: i32) -> (i32, i32) {
    %c0_i32 = arith.constant 0 : i32
    %c0_i32_0 = arith.constant 0 : i32
    %c0_i32_1 = arith.constant 0 : i32
    return %c0_i32, %c0_i32_0 : i32, i32
  }
  func.func @transform_14(%arg0: i32, %arg1: i32) -> (i32, i32) {
    %c0_i32 = arith.constant 0 : i32
    %c0_i32_0 = arith.constant 0 : i32
    %c0_i32_1 = arith.constant 0 : i32
    return %c0_i32, %c0_i32_0 : i32, i32
  }
  func.func @transform_15(%arg0: i32, %arg1: i32) -> (i32, i32) {
    %c0_i32 = arith.constant 0 : i32
    %c0_i32_0 = arith.constant 0 : i32
    %c0_i32_1 = arith.constant 0 : i32
    return %c0_i32, %c0_i32_0 : i32, i32
  }
  func.func @transform_16(%arg0: i32, %arg1: i32) -> (i32, i32, i32, i32) {
    %c0_i32 = arith.constant 0 : i32
    %c0_i32_0 = arith.constant 0 : i32
    %c0_i32_1 = arith.constant 0 : i32
    return %arg0, %arg1, %c0_i32, %c0_i32_0 : i32, i32, i32, i32
  }
}

</mosaic_0001>

<llo_original>
// kernel: tpu_custom_call.1
$region0: #{tpu_custom_call.1}
  #allocation0 [shape = 'u32[]', space=smem, size = 0x4, offset = 0x4, fixed_abs, tag = 'smem constant byte address 0x4 - core index']
  #allocation1 [shape = 'u32[72,128]{1,0:T(1,128)}', space=vmem, size = 0x9000, scoped, tag = 'internal scratch']
  %s0 = inlined_call_operand.vmem [shape: f32[2,4,8,8], index: 0, kind: input, shape index: {}]
  %s1 = inlined_call_operand.vmem [shape: f32[2,4,8,1], index: 1, kind: input, shape index: {}]
  %s2 = inlined_call_operand.hbm [shape: f32[8,32], index: 2, kind: input, shape index: {}]
  %s3 = inlined_call_operand.hbm [shape: bf16[8,32], index: 3, kind: input, shape index: {}]
  %s4 = inlined_call_operand.hbm [shape: f32[1,32], index: 4, kind: input, shape index: {}]
  %s5 = inlined_call_operand.hbm [shape: f32[1,32], index: 5, kind: input, shape index: {}]
  %s6 = inlined_call_operand.hbm [shape: f32[1,32], index: 6, kind: input, shape index: {}]
  %s7 = inlined_call_operand.hbm [shape: bf16[32,32], index: 7, kind: input, shape index: {}]
  %s8 = inlined_call_operand.hbm [shape: f32[1,32], index: 8, kind: input, shape index: {}]
  %s9 = inlined_call_operand.vmem [shape: bf16[32,32], index: 9, kind: input, shape index: {}]
  %s10 = inlined_call_operand.hbm [shape: bf16[8,32], index: 10, kind: input, shape index: {}]
  %s11 = inlined_call_operand.vmem [shape: f32[1,32], index: 11, kind: input, shape index: {}]
  %s12 = inlined_call_operand.hbm [shape: bf16[32,32], index: 12, kind: input, shape index: {}]
  %s13 = inlined_call_operand.vmem [shape: f32[1,32], index: 13, kind: input, shape index: {}]
  %s14 = inlined_call_operand.hbm [shape: bf16[32,32], index: 14, kind: input, shape index: {}]
  %s15 = inlined_call_operand.vmem [shape: f32[1,32], index: 15, kind: input, shape index: {}]
  %s16 = inlined_call_operand.hbm [shape: f32[4,2,8,32], index: 16, kind: output, shape index: {}]
  %s17 = sld [smem:[#allocation0]]
  $region137: #{tpu_custom_call.1} parent=0
    _
  %s19 = ssub.s32 1, %s17
  %s20 = scalar_select 0, %s19, %s17
  $region1: #{tpu_custom_call.1} parent=0
    #allocation2 [shape = 'u8[4096]{0}', space=vmem, size = 0x1000, scoped, tag = 'input window, operand 2, single buffered']
    #allocation3 [shape = 's32[2]{0}', space=sflag, size = 0x8, scoped, tag = 'scoped memory for tpu_custom_call.1']
    #allocation4 [shape = 's32[2]{0}', space=sflag, size = 0x8, scoped, tag = 'scoped memory for tpu_custom_call.1']
    #allocation5 [shape = 'u8[2048]{0}', space=vmem, size = 0x800, scoped, tag = 'input window, operand 3, single buffered']
    #allocation6 [shape = 's32[1]{0}', space=sflag, size = 0x4, scoped, tag = 'scoped memory for tpu_custom_call.1']
    #allocation7 [shape = 'u8[512]{0}', space=vmem, size = 0x400, scoped, tag = 'input window, operand 4, single buffered']
    #allocation8 [shape = 'u8[512]{0}', space=vmem, size = 0x400, scoped, tag = 'input window, operand 5, single buffered']
    #allocation9 [shape = 's32[1]{0}', space=sflag, size = 0x4, scoped, tag = 'scoped memory for tpu_custom_call.1']
    #allocation10 [shape = 'u8[512]{0}', space=vmem, size = 0x400, scoped, tag = 'input window, operand 6, single buffered']
    #allocation11 [shape = 'u8[8192]{0}', space=vmem, size = 0x2000, scoped, tag = 'input window, operand 7, single buffered']
    #allocation12 [shape = 's32[1]{0}', space=sflag, size = 0x4, scoped, tag = 'scoped memory for tpu_custom_call.1']
    #allocation13 [shape = 'u8[512]{0}', space=vmem, size = 0x400, scoped, tag = 'input window, operand 8, single buffered']
    #allocation14 [shape = 'u8[2048]{0}', space=vmem, size = 0x800, scoped, tag = 'input window, operand 10, single buffered']
    #allocation15 [shape = 's32[1]{0}', space=sflag, size = 0x4, scoped, tag = 'scoped memory for tpu_custom_call.1']
    #allocation16 [shape = 'u8[8192]{0}', space=vmem, size = 0x2000, scoped, tag = 'input window, operand 12, single buffered']
    #allocation17 [shape = 'u8[8192]{0}', space=vmem, size = 0x2000, scoped, tag = 'input window, operand 14, single buffered']
    #allocation18 [shape = 's32[1]{0}', space=sflag, size = 0x4, scoped, tag = 'scoped memory for tpu_custom_call.1']
    #allocation19 [shape = 'u8[8192]{0}', space=vmem, size = 0x2000, scoped, tag = 'output window, operand 0']
    %21 = vsyncpa [#allocation3], 0
    %22 = vsyncpa [#allocation6], 0
    %23 = vsyncpa [#allocation9], 0
    %24 = vsyncpa [#allocation12], 0
    %25 = vsyncpa [#allocation15], 0
    %26 = vsyncpa [#allocation18], 0
    %27 = vsyncpa [#allocation4], 0
    %s28 = scalar_lea.sflag [#allocation4], 1
    %29 = vsyncpa %s28, 0
    loop: start=0, step=1, limit=10
    $region2: #{tpu_custom_call.1} parent=1 // loop_pre_header
      _
    $region3: #{tpu_custom_call.1} parent=1 // loop_header
      %s31 = sphi 0, %s35
      %p32 = scmp.ge.s32.totalorder %s31, 10
      %s38 = sphi 0, %s50
      %s39 = sphi 0, %s46
      %s40 = sphi 0, %s38
      %s41 = sphi 0, %s39
      %s42 = sphi 0, %s40
      %s43 = sphi 0, %s41
      %s55 = sphi 0, %s57
      %s58 = sphi 0, %s55
      %s59 = sphi 0, %s58
      %s75 = sphi 0, %s59
      %s83 = sphi 0, %s85
      %s86 = sphi 0, %s83
      %s87 = sphi 0, %s86
      %s103 = sphi 0, %s87
      %s107 = sphi 0, %s107
      %s109 = sphi 0, %s107
      %s110 = sphi 0, %s109
      %s124 = sphi 0, %s110
      %s128 = sphi 0, %s128
      %s130 = sphi 0, %s128
      %s131 = sphi 0, %s130
      %s145 = sphi 0, %s131
      %s149 = sphi 0, %s149
      %s151 = sphi 0, %s149
      %s152 = sphi 0, %s151
      %s166 = sphi 0, %s152
      %s170 = sphi 0, %s170
      %s172 = sphi 0, %s170
      %s173 = sphi 0, %s172
      %s187 = sphi 0, %s173
      %s191 = sphi 0, %s191
      %s193 = sphi 0, %s191
      %s194 = sphi 0, %s193
      %s208 = sphi 0, %s194
      %s212 = sphi 0, %s212
      %s214 = sphi 0, %s212
      %s215 = sphi 0, %s214
      %s229 = sphi 0, %s215
      %s233 = sphi 0, %s233
      %s235 = sphi 0, %s233
      %s236 = sphi 0, %s235
      %s250 = sphi 0, %s236
      %s254 = sphi 0, %s254
      %s256 = sphi 0, %s254
      %s257 = sphi 0, %s256
      %s271 = sphi 0, %s257
      %s275 = sphi 0, %s275
      %s277 = sphi 0, %s275
      %s278 = sphi 0, %s277
      %s292 = sphi 0, %s278
      %s296 = sphi 0, %s296
      %s298 = sphi 0, %s296
      %s299 = sphi 0, %s298
      %s313 = sphi 0, %s299
      %s317 = sphi 0, %s317
      %s319 = sphi 0, %s317
      %s320 = sphi 0, %s319
      %s334 = sphi 0, %s320
      %s338 = sphi 0, %s338
      %s340 = sphi 0, %s338
      %s341 = sphi 0, %s340
      %s355 = sphi 0, %s341
      %s359 = sphi 0, %s359
      %s361 = sphi 0, %s359
      %s362 = sphi 0, %s361
      %s376 = sphi 0, %s362
      %s380 = sphi 0, %s380
      %s382 = sphi 0, %s380
      %s383 = sphi 0, %s382
      %s397 = sphi 0, %s383
      %s405 = sphi 0, %s407
      %s408 = sphi 0, %s405
      %s409 = sphi 0, %s408
      %s425 = sphi 0, %s409
    $region4: #{tpu_custom_call.1} parent=1 // loop_header_branch
      %34 = sbr.rel (%p32) target = $region8
    $region5: #{tpu_custom_call.1} parent=1 // loop_body
      %s36 = ssub.s32 %s31, 1
      %s37 = ssub.s32 %s31, 2
      %s44 = sadd.s32 1, %s39
      %p45 = scmp.ge.s32.totalorder %s44, 2
      %s46 = scalar_select %p45, 0, %s44
      %s47 = sadd.s32 1, %s38
      %s48 = scalar_select %p45, %s47, %s38
      %p49 = scmp.ge.s32.totalorder %s48, 4
      %s50 = scalar_select %p49, 0, %s48
      %s51 = ssub.s32 %s39, %s46
      %s52 = ssub.s32 %s38, %s50
      %s53 = sor.u32 %s51, %s52
      %p54 = scmp.eq.s32.totalorder %s53, 0
      %s56 = sadd.s32 %s55, 1
      %s57 = scalar_select %p54, %s55, %s56
      %p60 = pneg %p54
      %p61 = scmp.eq.s32.totalorder %s31, 7
      %p62 = por %p60, %p61
      %p63 = scmp.ne.s32.totalorder %s55, %s58
      %p64 = scmp.eq.s32.totalorder %s31, 0
      %p65 = por %p63, %p64
      %p66 = scmp.ne.s32.totalorder %s55, %s58
      %p67 = scmp.eq.s32.totalorder %s36, 7
      %p68 = por %p66, %p67
      %p69 = scmp.ne.s32.totalorder %s58, %s59
      %p70 = scmp.eq.s32.totalorder %s36, 0
      %p71 = por %p69, %p70
      %p72 = scmp.ne.s32.totalorder %s58, %s59
      %p73 = scmp.eq.s32.totalorder %s37, 7
      %p74 = por %p72, %p73
      %p76 = scmp.ne.s32.totalorder %s59, %s75
      %p77 = scmp.eq.s32.totalorder %s37, 0
      %p78 = por %p76, %p77
      %s79 = ssub.s32 %s39, %s46
      %s80 = ssub.s32 %s38, %s50
      %s81 = sor.u32 %s79, %s80
      %p82 = scmp.eq.s32.totalorder %s81, 0
      %s84 = sadd.s32 %s83, 1
      %s85 = scalar_select %p82, %s83, %s84
      %p88 = pneg %p82
      %p89 = scmp.eq.s32.totalorder %s31, 7
      %p90 = por %p88, %p89
      %p91 = scmp.ne.s32.totalorder %s83, %s86
      %p92 = scmp.eq.s32.totalorder %s31, 0
      %p93 = por %p91, %p92
      %p94 = scmp.ne.s32.totalorder %s83, %s86
      %p95 = scmp.eq.s32.totalorder %s36, 7
      %p96 = por %p94, %p95
      %p97 = scmp.ne.s32.totalorder %s86, %s87
      %p98 = scmp.eq.s32.totalorder %s36, 0
      %p99 = por %p97, %p98
      %p100 = scmp.ne.s32.totalorder %s86, %s87
      %p101 = scmp.eq.s32.totalorder %s37, 7
      %p102 = por %p100, %p101
      %p104 = scmp.ne.s32.totalorder %s87, %s103
      %p105 = scmp.eq.s32.totalorder %s37, 0
      %p106 = por %p104, %p105
      %s108 = sadd.s32 %s107, 1
      %p111 = scmp.eq.s32.totalorder %s31, 7
      %p112 = scmp.ne.s32.totalorder %s107, %s109
      %p113 = scmp.eq.s32.totalorder %s31, 0
      %p114 = por %p112, %p113
      %p115 = scmp.ne.s32.totalorder %s107, %s109
      %p116 = scmp.eq.s32.totalorder %s36, 7
      %p117 = por %p115, %p116
      %p118 = scmp.ne.s32.totalorder %s109, %s110
      %p119 = scmp.eq.s32.totalorder %s36, 0
      %p120 = por %p118, %p119
      %p121 = scmp.ne.s32.totalorder %s109, %s110
      %p122 = scmp.eq.s32.totalorder %s37, 7
      %p123 = por %p121, %p122
      %p125 = scmp.ne.s32.totalorder %s110, %s124
      %p126 = scmp.eq.s32.totalorder %s37, 0
      %p127 = por %p125, %p126
      %s129 = sadd.s32 %s128, 1
      %p132 = scmp.eq.s32.totalorder %s31, 7
      %p133 = scmp.ne.s32.totalorder %s128, %s130
      %p134 = scmp.eq.s32.totalorder %s31, 0
      %p135 = por %p133, %p134
      %p136 = scmp.ne.s32.totalorder %s128, %s130
      %p137 = scmp.eq.s32.totalorder %s36, 7
      %p138 = por %p136, %p137
      %p139 = scmp.ne.s32.totalorder %s130, %s131
      %p140 = scmp.eq.s32.totalorder %s36, 0
      %p141 = por %p139, %p140
      %p142 = scmp.ne.s32.totalorder %s130, %s131
      %p143 = scmp.eq.s32.totalorder %s37, 7
      %p144 = por %p142, %p143
      %p146 = scmp.ne.s32.totalorder %s131, %s145
      %p147 = scmp.eq.s32.totalorder %s37, 0
      %p148 = por %p146, %p147
      %s150 = sadd.s32 %s149, 1
      %p153 = scmp.eq.s32.totalorder %s31, 7
      %p154 = scmp.ne.s32.totalorder %s149, %s151
      %p155 = scmp.eq.s32.totalorder %s31, 0
      %p156 = por %p154, %p155
      %p157 = scmp.ne.s32.totalorder %s149, %s151
      %p158 = scmp.eq.s32.totalorder %s36, 7
      %p159 = por %p157, %p158
      %p160 = scmp.ne.s32.totalorder %s151, %s152
      %p161 = scmp.eq.s32.totalorder %s36, 0
      %p162 = por %p160, %p161
      %p163 = scmp.ne.s32.totalorder %s151, %s152
      %p164 = scmp.eq.s32.totalorder %s37, 7
      %p165 = por %p163, %p164
      %p167 = scmp.ne.s32.totalorder %s152, %s166
      %p168 = scmp.eq.s32.totalorder %s37, 0
      %p169 = por %p167, %p168
      %s171 = sadd.s32 %s170, 1
      %p174 = scmp.eq.s32.totalorder %s31, 7
      %p175 = scmp.ne.s32.totalorder %s170, %s172
      %p176 = scmp.eq.s32.totalorder %s31, 0
      %p177 = por %p175, %p176
      %p178 = scmp.ne.s32.totalorder %s170, %s172
      %p179 = scmp.eq.s32.totalorder %s36, 7
      %p180 = por %p178, %p179
      %p181 = scmp.ne.s32.totalorder %s172, %s173
      %p182 = scmp.eq.s32.totalorder %s36, 0
      %p183 = por %p181, %p182
      %p184 = scmp.ne.s32.totalorder %s172, %s173
      %p185 = scmp.eq.s32.totalorder %s37, 7
      %p186 = por %p184, %p185
      %p188 = scmp.ne.s32.totalorder %s173, %s187
      %p189 = scmp.eq.s32.totalorder %s37, 0
      %p190 = por %p188, %p189
      %s192 = sadd.s32 %s191, 1
      %p195 = scmp.eq.s32.totalorder %s31, 7
      %p196 = scmp.ne.s32.totalorder %s191, %s193
      %p197 = scmp.eq.s32.totalorder %s31, 0
      %p198 = por %p196, %p197
      %p199 = scmp.ne.s32.totalorder %s191, %s193
      %p200 = scmp.eq.s32.totalorder %s36, 7
      %p201 = por %p199, %p200
      %p202 = scmp.ne.s32.totalorder %s193, %s194
      %p203 = scmp.eq.s32.totalorder %s36, 0
      %p204 = por %p202, %p203
      %p205 = scmp.ne.s32.totalorder %s193, %s194
      %p206 = scmp.eq.s32.totalorder %s37, 7
      %p207 = por %p205, %p206
      %p209 = scmp.ne.s32.totalorder %s194, %s208
      %p210 = scmp.eq.s32.totalorder %s37, 0
      %p211 = por %p209, %p210
      %s213 = sadd.s32 %s212, 1
      %p216 = scmp.eq.s32.totalorder %s31, 7
      %p217 = scmp.ne.s32.totalorder %s212, %s214
      %p218 = scmp.eq.s32.totalorder %s31, 0
      %p219 = por %p217, %p218
      %p220 = scmp.ne.s32.totalorder %s212, %s214
      %p221 = scmp.eq.s32.totalorder %s36, 7
      %p222 = por %p220, %p221
      %p223 = scmp.ne.s32.totalorder %s214, %s215
      %p224 = scmp.eq.s32.totalorder %s36, 0
      %p225 = por %p223, %p224
      %p226 = scmp.ne.s32.totalorder %s214, %s215
      %p227 = scmp.eq.s32.totalorder %s37, 7
      %p228 = por %p226, %p227
      %p230 = scmp.ne.s32.totalorder %s215, %s229
      %p231 = scmp.eq.s32.totalorder %s37, 0
      %p232 = por %p230, %p231
      %s234 = sadd.s32 %s233, 1
      %p237 = scmp.eq.s32.totalorder %s31, 7
      %p238 = scmp.ne.s32.totalorder %s233, %s235
      %p239 = scmp.eq.s32.totalorder %s31, 0
      %p240 = por %p238, %p239
      %p241 = scmp.ne.s32.totalorder %s233, %s235
      %p242 = scmp.eq.s32.totalorder %s36, 7
      %p243 = por %p241, %p242
      %p244 = scmp.ne.s32.totalorder %s235, %s236
      %p245 = scmp.eq.s32.totalorder %s36, 0
      %p246 = por %p244, %p245
      %p247 = scmp.ne.s32.totalorder %s235, %s236
      %p248 = scmp.eq.s32.totalorder %s37, 7
      %p249 = por %p247, %p248
      %p251 = scmp.ne.s32.totalorder %s236, %s250
      %p252 = scmp.eq.s32.totalorder %s37, 0
      %p253 = por %p251, %p252
      %s255 = sadd.s32 %s254, 1
      %p258 = scmp.eq.s32.totalorder %s31, 7
      %p259 = scmp.ne.s32.totalorder %s254, %s256
      %p260 = scmp.eq.s32.totalorder %s31, 0
      %p261 = por %p259, %p260
      %p262 = scmp.ne.s32.totalorder %s254, %s256
      %p263 = scmp.eq.s32.totalorder %s36, 7
      %p264 = por %p262, %p263
      %p265 = scmp.ne.s32.totalorder %s256, %s257
      %p266 = scmp.eq.s32.totalorder %s36, 0
      %p267 = por %p265, %p266
      %p268 = scmp.ne.s32.totalorder %s256, %s257
      %p269 = scmp.eq.s32.totalorder %s37, 7
      %p270 = por %p268, %p269
      %p272 = scmp.ne.s32.totalorder %s257, %s271
      %p273 = scmp.eq.s32.totalorder %s37, 0
      %p274 = por %p272, %p273
      %s276 = sadd.s32 %s275, 1
      %p279 = scmp.eq.s32.totalorder %s31, 7
      %p280 = scmp.ne.s32.totalorder %s275, %s277
      %p281 = scmp.eq.s32.totalorder %s31, 0
      %p282 = por %p280, %p281
      %p283 = scmp.ne.s32.totalorder %s275, %s277
      %p284 = scmp.eq.s32.totalorder %s36, 7
      %p285 = por %p283, %p284
      %p286 = scmp.ne.s32.totalorder %s277, %s278
      %p287 = scmp.eq.s32.totalorder %s36, 0
      %p288 = por %p286, %p287
      %p289 = scmp.ne.s32.totalorder %s277, %s278
      %p290 = scmp.eq.s32.totalorder %s37, 7
      %p291 = por %p289, %p290
      %p293 = scmp.ne.s32.totalorder %s278, %s292
      %p294 = scmp.eq.s32.totalorder %s37, 0
      %p295 = por %p293, %p294
      %s297 = sadd.s32 %s296, 1
      %p300 = scmp.eq.s32.totalorder %s31, 7
      %p301 = scmp.ne.s32.totalorder %s296, %s298
      %p302 = scmp.eq.s32.totalorder %s31, 0
      %p303 = por %p301, %p302
      %p304 = scmp.ne.s32.totalorder %s296, %s298
      %p305 = scmp.eq.s32.totalorder %s36, 7
      %p306 = por %p304, %p305
      %p307 = scmp.ne.s32.totalorder %s298, %s299
      %p308 = scmp.eq.s32.totalorder %s36, 0
      %p309 = por %p307, %p308
      %p310 = scmp.ne.s32.totalorder %s298, %s299
      %p311 = scmp.eq.s32.totalorder %s37, 7
      %p312 = por %p310, %p311
      %p314 = scmp.ne.s32.totalorder %s299, %s313
      %p315 = scmp.eq.s32.totalorder %s37, 0
      %p316 = por %p314, %p315
      %s318 = sadd.s32 %s317, 1
      %p321 = scmp.eq.s32.totalorder %s31, 7
      %p322 = scmp.ne.s32.totalorder %s317, %s319
      %p323 = scmp.eq.s32.totalorder %s31, 0
      %p324 = por %p322, %p323
      %p325 = scmp.ne.s32.totalorder %s317, %s319
      %p326 = scmp.eq.s32.totalorder %s36, 7
      %p327 = por %p325, %p326
      %p328 = scmp.ne.s32.totalorder %s319, %s320
      %p329 = scmp.eq.s32.totalorder %s36, 0
      %p330 = por %p328, %p329
      %p331 = scmp.ne.s32.totalorder %s319, %s320
      %p332 = scmp.eq.s32.totalorder %s37, 7
      %p333 = por %p331, %p332
      %p335 = scmp.ne.s32.totalorder %s320, %s334
      %p336 = scmp.eq.s32.totalorder %s37, 0
      %p337 = por %p335, %p336
      %s339 = sadd.s32 %s338, 1
      %p342 = scmp.eq.s32.totalorder %s31, 7
      %p343 = scmp.ne.s32.totalorder %s338, %s340
      %p344 = scmp.eq.s32.totalorder %s31, 0
      %p345 = por %p343, %p344
      %p346 = scmp.ne.s32.totalorder %s338, %s340
      %p347 = scmp.eq.s32.totalorder %s36, 7
      %p348 = por %p346, %p347
      %p349 = scmp.ne.s32.totalorder %s340, %s341
      %p350 = scmp.eq.s32.totalorder %s36, 0
      %p351 = por %p349, %p350
      %p352 = scmp.ne.s32.totalorder %s340, %s341
      %p353 = scmp.eq.s32.totalorder %s37, 7
      %p354 = por %p352, %p353
      %p356 = scmp.ne.s32.totalorder %s341, %s355
      %p357 = scmp.eq.s32.totalorder %s37, 0
      %p358 = por %p356, %p357
      %s360 = sadd.s32 %s359, 1
      %p363 = scmp.eq.s32.totalorder %s31, 7
      %p364 = scmp.ne.s32.totalorder %s359, %s361
      %p365 = scmp.eq.s32.totalorder %s31, 0
      %p366 = por %p364, %p365
      %p367 = scmp.ne.s32.totalorder %s359, %s361
      %p368 = scmp.eq.s32.totalorder %s36, 7
      %p369 = por %p367, %p368
      %p370 = scmp.ne.s32.totalorder %s361, %s362
      %p371 = scmp.eq.s32.totalorder %s36, 0
      %p372 = por %p370, %p371
      %p373 = scmp.ne.s32.totalorder %s361, %s362
      %p374 = scmp.eq.s32.totalorder %s37, 7
      %p375 = por %p373, %p374
      %p377 = scmp.ne.s32.totalorder %s362, %s376
      %p378 = scmp.eq.s32.totalorder %s37, 0
      %p379 = por %p377, %p378
      %s381 = sadd.s32 %s380, 1
      %p384 = scmp.eq.s32.totalorder %s31, 7
      %p385 = scmp.ne.s32.totalorder %s380, %s382
      %p386 = scmp.eq.s32.totalorder %s31, 0
      %p387 = por %p385, %p386
      %p388 = scmp.ne.s32.totalorder %s380, %s382
      %p389 = scmp.eq.s32.totalorder %s36, 7
      %p390 = por %p388, %p389
      %p391 = scmp.ne.s32.totalorder %s382, %s383
      %p392 = scmp.eq.s32.totalorder %s36, 0
      %p393 = por %p391, %p392
      %p394 = scmp.ne.s32.totalorder %s382, %s383
      %p395 = scmp.eq.s32.totalorder %s37, 7
      %p396 = por %p394, %p395
      %p398 = scmp.ne.s32.totalorder %s383, %s397
      %p399 = scmp.eq.s32.totalorder %s37, 0
      %p400 = por %p398, %p399
      %s401 = ssub.s32 %s38, %s50
      %s402 = ssub.s32 %s39, %s46
      %s403 = sor.u32 %s401, %s402
      %p404 = scmp.eq.s32.totalorder %s403, 0
      %s406 = sadd.s32 %s405, 1
      %s407 = scalar_select %p404, %s405, %s406
      %p410 = pneg %p404
      %p411 = scmp.eq.s32.totalorder %s31, 7
      %p412 = por %p410, %p411
      %p413 = scmp.ne.s32.totalorder %s405, %s408
      %p414 = scmp.eq.s32.totalorder %s31, 0
      %p415 = por %p413, %p414
      %p416 = scmp.ne.s32.totalorder %s405, %s408
      %p417 = scmp.eq.s32.totalorder %s36, 7
      %p418 = por %p416, %p417
      %p419 = scmp.ne.s32.totalorder %s408, %s409
      %p420 = scmp.eq.s32.totalorder %s36, 0
      %p421 = por %p419, %p420
      %p422 = scmp.ne.s32.totalorder %s408, %s409
      %p423 = scmp.eq.s32.totalorder %s37, 7
      %p424 = por %p422, %p423
      %p426 = scmp.ne.s32.totalorder %s409, %s425
      %p427 = scmp.eq.s32.totalorder %s37, 0
      %p428 = por %p426, %p427
      %p429 = scmp.le.s32.totalorder 1, %s31
      %p430 = scmp.lt.s32.totalorder %s31, 9
      %p431 = pnand %p429, %p430
      %p432 = pneg %p431
      // Predicated region
      $region9: #{tpu_custom_call.1} parent=5 // pred_check
        _
      $region10: #{tpu_custom_call.1} parent=5 // pred_check_branch
        %434 = sbr.rel (%p431) target = $region12
      $region11: #{tpu_custom_call.1} parent=5 // pred_region
        %s435 = ssub.s32 %s31, 1
        // Predicated region
        $region13: #{tpu_custom_call.1} parent=11 // pred_check
          %p436 = pneg %p120
        $region14: #{tpu_custom_call.1} parent=11 // pred_check_branch
          %438 = sbr.rel (%p436) target = $region16
        $region15: #{tpu_custom_call.1} parent=11 // pred_region
          %440 = vsyncadd [#allocation3], 0
          %s442 = sshll.u32 %s2, 4
          %s443 = int_to_ptr.hbm [resolvable:$true] %s442
          %s444 = sshll.u32 [#allocation2], 4
          %s445 = int_to_ptr.vmem [resolvable:$true] %s444
          %447 = dma.hbm_to_vmem [thread:$0]  %s443, 128, %s445, [#allocation3]
        $region16: #{tpu_custom_call.1} parent=11 // pred_fallthru
          _
        // Predicated region
        $region17: #{tpu_custom_call.1} parent=11 // pred_check
          %p448 = pneg %p141
        $region18: #{tpu_custom_call.1} parent=11 // pred_check_branch
          %450 = sbr.rel (%p448) target = $region20
        $region19: #{tpu_custom_call.1} parent=11 // pred_region
          %452 = vsyncadd [#allocation6], 0
          %s454 = sshll.u32 %s3, 4
          %s455 = int_to_ptr.hbm [resolvable:$true] %s454
          %s456 = sshll.u32 [#allocation5], 4
          %s457 = int_to_ptr.vmem [resolvable:$true] %s456
          %459 = dma.hbm_to_vmem [thread:$0]  %s455, 64, %s457, [#allocation6]
        $region20: #{tpu_custom_call.1} parent=11 // pred_fallthru
          _
        // Predicated region
        $region21: #{tpu_custom_call.1} parent=11 // pred_check
          %p460 = pneg %p162
        $region22: #{tpu_custom_call.1} parent=11 // pred_check_branch
          %462 = sbr.rel (%p460) target = $region24
        $region23: #{tpu_custom_call.1} parent=11 // pred_region
          %464 = vsyncadd [#allocation6], 0
          %s466 = sshll.u32 %s4, 4
          %s467 = int_to_ptr.hbm [resolvable:$true] %s466
          %s468 = sshll.u32 [#allocation7], 4
          %s469 = int_to_ptr.vmem [resolvable:$true] %s468
          %471 = dma.hbm_to_vmem [thread:$0]  %s467, 16, %s469, [#allocation6]
        $region24: #{tpu_custom_call.1} parent=11 // pred_fallthru
          _
        // Predicated region
        $region25: #{tpu_custom_call.1} parent=11 // pred_check
          %p472 = pneg %p183
        $region26: #{tpu_custom_call.1} parent=11 // pred_check_branch
          %474 = sbr.rel (%p472) target = $region28
        $region27: #{tpu_custom_call.1} parent=11 // pred_region
          %476 = vsyncadd [#allocation9], 0
          %s478 = sshll.u32 %s5, 4
          %s479 = int_to_ptr.hbm [resolvable:$true] %s478
          %s480 = sshll.u32 [#allocation8], 4
          %s481 = int_to_ptr.vmem [resolvable:$true] %s480
          %483 = dma.hbm_to_vmem [thread:$0]  %s479, 16, %s481, [#allocation9]
        $region28: #{tpu_custom_call.1} parent=11 // pred_fallthru
          _
        // Predicated region
        $region29: #{tpu_custom_call.1} parent=11 // pred_check
          %p484 = pneg %p204
        $region30: #{tpu_custom_call.1} parent=11 // pred_check_branch
          %486 = sbr.rel (%p484) target = $region32
        $region31: #{tpu_custom_call.1} parent=11 // pred_region
          %488 = vsyncadd [#allocation9], 0
          %s490 = sshll.u32 %s6, 4
          %s491 = int_to_ptr.hbm [resolvable:$true] %s490
          %s492 = sshll.u32 [#allocation10], 4
          %s493 = int_to_ptr.vmem [resolvable:$true] %s492
          %495 = dma.hbm_to_vmem [thread:$0]  %s491, 16, %s493, [#allocation9]
        $region32: #{tpu_custom_call.1} parent=11 // pred_fallthru
          _
        // Predicated region
        $region33: #{tpu_custom_call.1} parent=11 // pred_check
          %p496 = pneg %p225
        $region34: #{tpu_custom_call.1} parent=11 // pred_check_branch
          %498 = sbr.rel (%p496) target = $region36
        $region35: #{tpu_custom_call.1} parent=11 // pred_region
          %500 = vsyncadd [#allocation12], 0
          %s501 = sshll.u32 %s7, 4
          %s502 = int_to_ptr.hbm [resolvable:$true] %s501
          %s503 = sshll.u32 [#allocation11], 4
          %s504 = int_to_ptr.vmem [resolvable:$true] %s503
          %509 = dma.hbm_to_vmem [thread:$0]  %s502, 256, %s504, [#allocation12], 64, 64, 4
        $region36: #{tpu_custom_call.1} parent=11 // pred_fallthru
          _
        // Predicated region
        $region37: #{tpu_custom_call.1} parent=11 // pred_check
          %p510 = pneg %p246
        $region38: #{tpu_custom_call.1} parent=11 // pred_check_branch
          %512 = sbr.rel (%p510) target = $region40
        $region39: #{tpu_custom_call.1} parent=11 // pred_region
          %514 = vsyncadd [#allocation12], 0
          %s516 = sshll.u32 %s8, 4
          %s517 = int_to_ptr.hbm [resolvable:$true] %s516
          %s518 = sshll.u32 [#allocation13], 4
          %s519 = int_to_ptr.vmem [resolvable:$true] %s518
          %521 = dma.hbm_to_vmem [thread:$0]  %s517, 16, %s519, [#allocation12]
        $region40: #{tpu_custom_call.1} parent=11 // pred_fallthru
          _
        // Predicated region
        $region41: #{tpu_custom_call.1} parent=11 // pred_check
          %p522 = pneg %p267
        $region42: #{tpu_custom_call.1} parent=11 // pred_check_branch
          %524 = sbr.rel (%p522) target = $region44
        $region43: #{tpu_custom_call.1} parent=11 // pred_region
          _
        $region44: #{tpu_custom_call.1} parent=11 // pred_fallthru
          _
        // Predicated region
        $region45: #{tpu_custom_call.1} parent=11 // pred_check
          %p525 = pneg %p288
        $region46: #{tpu_custom_call.1} parent=11 // pred_check_branch
          %527 = sbr.rel (%p525) target = $region48
        $region47: #{tpu_custom_call.1} parent=11 // pred_region
          %529 = vsyncadd [#allocation15], 0
          %s531 = sshll.u32 %s10, 4
          %s532 = int_to_ptr.hbm [resolvable:$true] %s531
          %s533 = sshll.u32 [#allocation14], 4
          %s534 = int_to_ptr.vmem [resolvable:$true] %s533
          %536 = dma.hbm_to_vmem [thread:$0]  %s532, 64, %s534, [#allocation15]
        $region48: #{tpu_custom_call.1} parent=11 // pred_fallthru
          _
        // Predicated region
        $region49: #{tpu_custom_call.1} parent=11 // pred_check
          %p537 = pneg %p309
        $region50: #{tpu_custom_call.1} parent=11 // pred_check_branch
          %539 = sbr.rel (%p537) target = $region52
        $region51: #{tpu_custom_call.1} parent=11 // pred_region
          _
        $region52: #{tpu_custom_call.1} parent=11 // pred_fallthru
          _
        // Predicated region
        $region53: #{tpu_custom_call.1} parent=11 // pred_check
          %p540 = pneg %p330
        $region54: #{tpu_custom_call.1} parent=11 // pred_check_branch
          %542 = sbr.rel (%p540) target = $region56
        $region55: #{tpu_custom_call.1} parent=11 // pred_region
          %544 = vsyncadd [#allocation15], 0
          %s545 = sshll.u32 %s12, 4
          %s546 = int_to_ptr.hbm [resolvable:$true] %s545
          %s547 = sshll.u32 [#allocation16], 4
          %s548 = int_to_ptr.vmem [resolvable:$true] %s547
          %553 = dma.hbm_to_vmem [thread:$0]  %s546, 256, %s548, [#allocation15], 64, 64, 4
        $region56: #{tpu_custom_call.1} parent=11 // pred_fallthru
          _
        // Predicated region
        $region57: #{tpu_custom_call.1} parent=11 // pred_check
          %p554 = pneg %p351
        $region58: #{tpu_custom_call.1} parent=11 // pred_check_branch
          %556 = sbr.rel (%p554) target = $region60
        $region59: #{tpu_custom_call.1} parent=11 // pred_region
          _
        $region60: #{tpu_custom_call.1} parent=11 // pred_fallthru
          _
        // Predicated region
        $region61: #{tpu_custom_call.1} parent=11 // pred_check
          %p557 = pneg %p372
        $region62: #{tpu_custom_call.1} parent=11 // pred_check_branch
          %559 = sbr.rel (%p557) target = $region64
        $region63: #{tpu_custom_call.1} parent=11 // pred_region
          %561 = vsyncadd [#allocation18], 0
          %s562 = sshll.u32 %s14, 4
          %s563 = int_to_ptr.hbm [resolvable:$true] %s562
          %s564 = sshll.u32 [#allocation17], 4
          %s565 = int_to_ptr.vmem [resolvable:$true] %s564
          %570 = dma.hbm_to_vmem [thread:$0]  %s563, 256, %s565, [#allocation18], 64, 64, 4
        $region64: #{tpu_custom_call.1} parent=11 // pred_fallthru
          _
        // Predicated region
        $region65: #{tpu_custom_call.1} parent=11 // pred_check
          %p571 = pneg %p393
        $region66: #{tpu_custom_call.1} parent=11 // pred_check_branch
          %573 = sbr.rel (%p571) target = $region68
        $region67: #{tpu_custom_call.1} parent=11 // pred_region
          _
        $region68: #{tpu_custom_call.1} parent=11 // pred_fallthru
          _
      $region12: #{tpu_custom_call.1} parent=5 // pred_fallthru
        _
      %p574 = scmp.lt.s32.totalorder %s31, 8
      // Predicated region
      $region69: #{tpu_custom_call.1} parent=5 // pred_check
        %p575 = pneg %p574
      $region70: #{tpu_custom_call.1} parent=5 // pred_check_branch
        %577 = sbr.rel (%p575) target = $region72
      $region71: #{tpu_custom_call.1} parent=5 // pred_region
        // Predicated region
        $region73: #{tpu_custom_call.1} parent=71 // pred_check
          %p578 = pneg %p65
        $region74: #{tpu_custom_call.1} parent=71 // pred_check_branch
          %580 = sbr.rel (%p578) target = $region76
        $region75: #{tpu_custom_call.1} parent=71 // pred_region
          %p581 = scmp.lt.s32.totalorder %s39, 1
          %s582 = scalar_select %p581, %s39, 1
          %p583 = scmp.lt.s32.totalorder %s38, 3
          %s584 = scalar_select %p583, %s38, 3
          %s585 = smul.addr %s582, 4
          %s586 = sadd.s32 %s584, %s585
          %s587 = smul.addr %s586, 8
          %s588 = scalar_lea.vmem %s0, %s587
        $region76: #{tpu_custom_call.1} parent=71 // pred_fallthru
          _
        // Predicated region
        $region77: #{tpu_custom_call.1} parent=71 // pred_check
          %p589 = pneg %p93
        $region78: #{tpu_custom_call.1} parent=71 // pred_check_branch
          %591 = sbr.rel (%p589) target = $region80
        $region79: #{tpu_custom_call.1} parent=71 // pred_region
          %p592 = scmp.lt.s32.totalorder %s39, 1
          %s593 = scalar_select %p592, %s39, 1
          %p594 = scmp.lt.s32.totalorder %s38, 3
          %s595 = scalar_select %p594, %s38, 3
          %s596 = smul.addr %s593, 4
          %s597 = sadd.s32 %s595, %s596
          %s598 = smul.addr %s597, 8
          %s599 = scalar_lea.vmem %s1, %s598
        $region80: #{tpu_custom_call.1} parent=71 // pred_fallthru
          _
      $region72: #{tpu_custom_call.1} parent=5 // pred_fallthru
        _
      %p600 = scmp.le.s32.totalorder 1, %s31
      %p601 = scmp.lt.s32.totalorder %s31, 9
      %p602 = pnand %p600, %p601
      %p603 = pneg %p602
      // Predicated region
      $region81: #{tpu_custom_call.1} parent=5 // pred_check
        _
      $region82: #{tpu_custom_call.1} parent=5 // pred_check_branch
        %605 = sbr.rel (%p602) target = $region84
      $region83: #{tpu_custom_call.1} parent=5 // pred_region
        %s606 = ssub.s32 %s31, 1
        // Predicated region
        $region85: #{tpu_custom_call.1} parent=83 // pred_check
          %p607 = pneg %p120
        $region86: #{tpu_custom_call.1} parent=83 // pred_check_branch
          %609 = sbr.rel (%p607) target = $region88
        $region87: #{tpu_custom_call.1} parent=83 // pred_region
          %611 = dma.done [#allocation3], 128
        $region88: #{tpu_custom_call.1} parent=83 // pred_fallthru
          _
        // Predicated region
        $region89: #{tpu_custom_call.1} parent=83 // pred_check
          %p612 = pneg %p141
        $region90: #{tpu_custom_call.1} parent=83 // pred_check_branch
          %614 = sbr.rel (%p612) target = $region92
        $region91: #{tpu_custom_call.1} parent=83 // pred_region
          %616 = dma.done [#allocation6], 64
        $region92: #{tpu_custom_call.1} parent=83 // pred_fallthru
          _
        // Predicated region
        $region93: #{tpu_custom_call.1} parent=83 // pred_check
          %p617 = pneg %p162
        $region94: #{tpu_custom_call.1} parent=83 // pred_check_branch
          %619 = sbr.rel (%p617) target = $region96
        $region95: #{tpu_custom_call.1} parent=83 // pred_region
          %621 = dma.done [#allocation6], 16
        $region96: #{tpu_custom_call.1} parent=83 // pred_fallthru
          _
        // Predicated region
        $region97: #{tpu_custom_call.1} parent=83 // pred_check
          %p622 = pneg %p183
        $region98: #{tpu_custom_call.1} parent=83 // pred_check_branch
          %624 = sbr.rel (%p622) target = $region100
        $region99: #{tpu_custom_call.1} parent=83 // pred_region
          %626 = dma.done [#allocation9], 16
        $region100: #{tpu_custom_call.1} parent=83 // pred_fallthru
          _
        // Predicated region
        $region101: #{tpu_custom_call.1} parent=83 // pred_check
          %p627 = pneg %p204
        $region102: #{tpu_custom_call.1} parent=83 // pred_check_branch
          %629 = sbr.rel (%p627) target = $region104
        $region103: #{tpu_custom_call.1} parent=83 // pred_region
          %631 = dma.done [#allocation9], 16
        $region104: #{tpu_custom_call.1} parent=83 // pred_fallthru
          _
        // Predicated region
        $region105: #{tpu_custom_call.1} parent=83 // pred_check
          %p632 = pneg %p225
        $region106: #{tpu_custom_call.1} parent=83 // pred_check_branch
          %634 = sbr.rel (%p632) target = $region108
        $region107: #{tpu_custom_call.1} parent=83 // pred_region
          %636 = dma.done [#allocation12], 256
        $region108: #{tpu_custom_call.1} parent=83 // pred_fallthru
          _
        // Predicated region
        $region109: #{tpu_custom_call.1} parent=83 // pred_check
          %p637 = pneg %p246
        $region110: #{tpu_custom_call.1} parent=83 // pred_check_branch
          %639 = sbr.rel (%p637) target = $region112
        $region111: #{tpu_custom_call.1} parent=83 // pred_region
          %641 = dma.done [#allocation12], 16
        $region112: #{tpu_custom_call.1} parent=83 // pred_fallthru
          _
        // Predicated region
        $region113: #{tpu_custom_call.1} parent=83 // pred_check
          %p642 = pneg %p288
        $region114: #{tpu_custom_call.1} parent=83 // pred_check_branch
          %644 = sbr.rel (%p642) target = $region116
        $region115: #{tpu_custom_call.1} parent=83 // pred_region
          %646 = dma.done [#allocation15], 64
        $region116: #{tpu_custom_call.1} parent=83 // pred_fallthru
          _
        // Predicated region
        $region117: #{tpu_custom_call.1} parent=83 // pred_check
          %p647 = pneg %p330
        $region118: #{tpu_custom_call.1} parent=83 // pred_check_branch
          %649 = sbr.rel (%p647) target = $region120
        $region119: #{tpu_custom_call.1} parent=83 // pred_region
          %651 = dma.done [#allocation15], 256
        $region120: #{tpu_custom_call.1} parent=83 // pred_fallthru
          _
        // Predicated region
        $region121: #{tpu_custom_call.1} parent=83 // pred_check
          %p652 = pneg %p372
        $region122: #{tpu_custom_call.1} parent=83 // pred_check_branch
          %654 = sbr.rel (%p652) target = $region124
        $region123: #{tpu_custom_call.1} parent=83 // pred_region
          %656 = dma.done [#allocation18], 256
        $region124: #{tpu_custom_call.1} parent=83 // pred_fallthru
          _
        %p657 = scmp.lt.s32.totalorder %s41, 1
        %s658 = scalar_select %p657, %s41, 1
        %p659 = scmp.lt.s32.totalorder %s40, 3
        %s660 = scalar_select %p659, %s40, 3
        %s661 = smul.addr %s658, 4
        %s662 = sadd.s32 %s660, %s661
        %s663 = smul.addr %s662, 8
        %s664 = scalar_lea.vmem %s0, %s663
        %p665 = pneg %p71
        %p666 = pneg %p68
        %p667 = scmp.lt.s32.totalorder %s41, 1
        %s668 = scalar_select %p667, %s41, 1
        %p669 = scmp.lt.s32.totalorder %s40, 3
        %s670 = scalar_select %p669, %s40, 3
        %s671 = smul.addr %s668, 4
        %s672 = sadd.s32 %s670, %s671
        %s673 = smul.addr %s672, 8
        %s674 = scalar_lea.vmem %s1, %s673
        %p675 = pneg %p99
        %p676 = pneg %p96
        %p677 = pneg %p120
        %p678 = pneg %p117
        %p679 = pneg %p141
        %p680 = pneg %p138
        %p681 = pneg %p162
        %p682 = pneg %p159
        %p683 = pneg %p183
        %p684 = pneg %p180
        %p685 = pneg %p204
        %p686 = pneg %p201
        %p687 = pneg %p225
        %p688 = pneg %p222
        %p689 = pneg %p246
        %p690 = pneg %p243
        %p691 = pneg %p267
        %p692 = pneg %p264
        %p693 = pneg %p288
        %p694 = pneg %p285
        %p695 = pneg %p309
        %p696 = pneg %p306
        %p697 = pneg %p330
        %p698 = pneg %p327
        %p699 = pneg %p351
        %p700 = pneg %p348
        %p701 = pneg %p372
        %p702 = pneg %p369
        %p703 = pneg %p393
        %p704 = pneg %p390
        %p705 = pneg %p421
        %p706 = pneg %p418
        %s707 = sand.u32 %s408, 1
        %s708 = scalar_lea.sflag [#allocation4], %s707
        %s709 = sand.u32 %s408, 1
        %s710 = smul.addr %s709, 8
        %s711 = scalar_lea.vmem [#allocation19], %s710
        %p712 = scmp.lt.s32.totalorder %s41, 1
        %s713 = scalar_select %p712, %s41, 1
        %p714 = scmp.lt.s32.totalorder %s40, 3
        %s715 = scalar_select %p714, %s40, 3
        %s716 = smul.addr %s713, 4
        %s717 = sadd.s32 %s715, %s716
        %s718 = smul.addr %s717, 8
        %s719 = scalar_lea.vmem %s0, %s718
        %p720 = scmp.lt.s32.totalorder %s41, 1
        %s721 = scalar_select %p720, %s41, 1
        %p722 = scmp.lt.s32.totalorder %s40, 3
        %s723 = scalar_select %p722, %s40, 3
        %s724 = smul.addr %s721, 4
        %s725 = sadd.s32 %s723, %s724
        %s726 = smul.addr %s725, 8
        %s727 = scalar_lea.vmem %s1, %s726
        %v729 = vld [vmem:[%s719] sm:$0xff]
        %v730 = vpack.c.bf16 %v729, %v729
        %v731 = vld [vmem:[%s727] sm:$0xff]
        %v732 = vld [vmem:[#allocation5] sm:$0xf]
        %v733 = vld [vmem:[#allocation7] sm:$0x1]
        %v735 = vperm.slane %v733, 0
        %vm737 = vcmask 64512
        %v739 = vsel %vm737, %v730, 0
        %vm741 = vcmask 1043456
        %v743 = vsel %vm741, %v732, 0
        %745 = vmatpush.bf16.msra.mxu0 0
        %746 = vmatpush.bf16.msra.mxu0 0
        %747 = vmatpush.bf16.msra.mxu0 0
        %748 = vmatpush.bf16.msra.mxu0 0
        %749 = vmatpush.bf16.msra.mxu0 0
        %750 = vmatpush.bf16.msra.mxu0 0
        %751 = vmatpush.bf16.msra.mxu0 0
        %752 = vmatpush.bf16.msra.mxu0 %v743
        %753 = vmatmul.bf16.gmra.mxu0 %v739
        %v754 = vpop.f32.mrf.mxu0
        %v755 = vadd.f32 %v735, %v754
        %v756 = vpop.f32.mrf.mxu0
        %757 = vdwg.mxu0
        %vm758 = vcmp.gt.f32.partialorder %v755, 0.0
        %v759 = vmul.f32 %v755, 0.01
        %v760 = vsel %vm758, %v755, %v759
        %v761 = vld [vmem:[#allocation8] sm:$0x1]
        %763 = vset.pattern.permute.xlu0 0
        %764 = vperm.xlu0 %763, %v731
        %v765 = vpop.permute.xlu0 %764
        %v768 = vperm.slane %v761, 0
        %v770 = vmul.f32 %v765, %v768
        %v771 = vld [vmem:[#allocation10] sm:$0x1]
        %v773 = vperm.slane %v771, 0
        %v775 = vadd.f32 %v770, %v773
        %vm776 = vcmp.gt.f32.partialorder %v775, 0.0
        %v777 = vmul.f32 %v775, 0.01
        %v778 = vsel %vm776, %v775, %v777
        %v779 = vld [vmem:[#allocation11] sm:$0xf]
        %v780 = vld [vmem:[#allocation11 + $0x4] sm:$0xf]
        %v781 = vld [vmem:[#allocation11 + $0x8] sm:$0xf]
        %v782 = vld [vmem:[#allocation11 + $0xc] sm:$0xf]
        %v783 = vpack.c.bf16 %v760, %v760
        %v784 = vld [vmem:[#allocation13] sm:$0x1]
        %v786 = vperm.slane %v784, 0
        %v792 = vunpack.c.l.b16 %v779
        %v793 = vunpack.c.l.b16 %v780
        %v794 = vunpack.c.l.b16 %v781
        %v795 = vunpack.c.l.b16 %v782
        %v796 = vpack.c.b16 %v793, %v792
        %v797 = vpack.c.b16 %v795, %v794
        %vm800 = vcmask 261120
        %v802 = vsel %vm800, %v783, 0
        %804 = vmatpush.bf16.msra.mxu0 0
        %805 = vmatpush.bf16.msra.mxu0 0
        %806 = vmatpush.bf16.msra.mxu0 0
        %807 = vmatpush.bf16.msra.mxu0 0
        %808 = vmatpush.bf16.msra.mxu0 0
        %809 = vmatpush.bf16.msra.mxu0 0
        %810 = vmatpush.bf16.msra.mxu0 %v797
        %811 = vmatpush.bf16.msra.mxu0 %v796
        %812 = vmatmul.bf16.gmra.mxu0 %v802
        %v813 = vpop.f32.mrf.mxu0
        %v814 = vadd.f32 %v786, %v813
        %v815 = vpop.f32.mrf.mxu0
        %816 = vdwg.mxu0
        %v817 = vld [vmem:[%s9] sm:$0xf]
        %v818 = vld [vmem:[%s9 + $0x4] sm:$0xf]
        %v819 = vld [vmem:[%s9 + $0x8] sm:$0xf]
        %v820 = vld [vmem:[%s9 + $0xc] sm:$0xf]
        %v821 = vpack.c.bf16 %v778, %v778
        %v826 = vunpack.c.l.b16 %v817
        %v827 = vunpack.c.l.b16 %v818
        %v828 = vunpack.c.l.b16 %v819
        %v829 = vunpack.c.l.b16 %v820
        %v830 = vpack.c.b16 %v827, %v826
        %v831 = vpack.c.b16 %v829, %v828
        %v835 = vsel %vm800, %v821, 0
        %837 = vmatpush.bf16.msra.mxu0 0
        %838 = vmatpush.bf16.msra.mxu0 0
        %839 = vmatpush.bf16.msra.mxu0 0
        %840 = vmatpush.bf16.msra.mxu0 0
        %841 = vmatpush.bf16.msra.mxu0 0
        %842 = vmatpush.bf16.msra.mxu0 0
        %843 = vmatpush.bf16.msra.mxu0 %v831
        %844 = vmatpush.bf16.msra.mxu0 %v830
        %845 = vmatmul.bf16.gmra.mxu0 %v835
        %v846 = vpop.f32.mrf.mxu0
        %v847 = vadd.f32 0.0, %v846
        %v848 = vpop.f32.mrf.mxu0
        %849 = vdwg.mxu0
        %v850 = vadd.f32 %v814, %v847
        %vm851 = vcmp.gt.f32.partialorder %v850, 0.0
        %v852 = vmul.f32 %v850, 0.01
        %v853 = vsel %vm851, %v850, %v852
        %v854 = vld [vmem:[#allocation14] sm:$0xf]
        %v856 = vsel %vm741, %v854, 0
        %858 = vmatpush.bf16.msra.mxu0 0
        %859 = vmatpush.bf16.msra.mxu0 0
        %860 = vmatpush.bf16.msra.mxu0 0
        %861 = vmatpush.bf16.msra.mxu0 0
        %862 = vmatpush.bf16.msra.mxu0 0
        %863 = vmatpush.bf16.msra.mxu0 0
        %864 = vmatpush.bf16.msra.mxu0 0
        %865 = vmatpush.bf16.msra.mxu0 %v856
        %866 = vmatmul.bf16.gmra.mxu0 %v739
        %v867 = vpop.f32.mrf.mxu0
        %v868 = vadd.f32 0.0, %v867
        %v869 = vpop.f32.mrf.mxu0
        %870 = vdwg.mxu0
        %v871 = vadd.f32 %v853, %v868
        %v872 = vld [vmem:[%s11] sm:$0x1]
        %v874 = vperm.slane %v872, 0
        %v876 = vadd.f32 %v871, %v874
        %v877 = vld [vmem:[#allocation16] sm:$0xf]
        %v878 = vld [vmem:[#allocation16 + $0x4] sm:$0xf]
        %v879 = vld [vmem:[#allocation16 + $0x8] sm:$0xf]
        %v880 = vld [vmem:[#allocation16 + $0xc] sm:$0xf]
        %v881 = vpack.c.bf16 %v876, %v876
        %v882 = vld [vmem:[%s13] sm:$0x1]
        %v884 = vperm.slane %v882, 0
        %v890 = vunpack.c.l.b16 %v877
        %v891 = vunpack.c.l.b16 %v878
        %v892 = vunpack.c.l.b16 %v879
        %v893 = vunpack.c.l.b16 %v880
        %v894 = vpack.c.b16 %v891, %v890
        %v895 = vpack.c.b16 %v893, %v892
        %v899 = vsel %vm800, %v881, 0
        %901 = vmatpush.bf16.msra.mxu0 0
        %902 = vmatpush.bf16.msra.mxu0 0
        %903 = vmatpush.bf16.msra.mxu0 0
        %904 = vmatpush.bf16.msra.mxu0 0
        %905 = vmatpush.bf16.msra.mxu0 0
        %906 = vmatpush.bf16.msra.mxu0 0
        %907 = vmatpush.bf16.msra.mxu0 %v895
        %908 = vmatpush.bf16.msra.mxu0 %v894
        %909 = vmatmul.bf16.gmra.mxu0 %v899
        %v910 = vpop.f32.mrf.mxu0
        %v911 = vadd.f32 %v884, %v910
        %v912 = vpop.f32.mrf.mxu0
        %913 = vdwg.mxu0
        %v914 = vld [vmem:[#allocation17] sm:$0xf]
        %v915 = vld [vmem:[#allocation17 + $0x4] sm:$0xf]
        %v916 = vld [vmem:[#allocation17 + $0x8] sm:$0xf]
        %v917 = vld [vmem:[#allocation17 + $0xc] sm:$0xf]
        %v918 = vpack.c.bf16 %v911, %v911
        %v919 = vld [vmem:[#allocation2] sm:$0xff]
        %v924 = vunpack.c.l.b16 %v914
        %v925 = vunpack.c.l.b16 %v915
        %v926 = vunpack.c.l.b16 %v916
        %v927 = vunpack.c.l.b16 %v917
        %v928 = vpack.c.b16 %v925, %v924
        %v929 = vpack.c.b16 %v927, %v926
        %v933 = vsel %vm800, %v918, 0
        %935 = vmatpush.bf16.msra.mxu0 0
        %936 = vmatpush.bf16.msra.mxu0 0
        %937 = vmatpush.bf16.msra.mxu0 0
        %938 = vmatpush.bf16.msra.mxu0 0
        %939 = vmatpush.bf16.msra.mxu0 0
        %940 = vmatpush.bf16.msra.mxu0 0
        %941 = vmatpush.bf16.msra.mxu0 %v929
        %942 = vmatpush.bf16.msra.mxu0 %v928
        %943 = vmatmul.bf16.gmra.mxu0 %v933
        %v944 = vpop.f32.mrf.mxu0
        %v945 = vadd.f32 %v919, %v944
        %v946 = vpop.f32.mrf.mxu0
        %947 = vdwg.mxu0
        %v948 = vld [vmem:[%s15] sm:$0x1]
        %v950 = vperm.slane %v948, 0
        %v952 = vadd.f32 %v945, %v950
        %vm953 = vcmp.gt.f32.partialorder %v952, 0.0
        %v954 = vmul.f32 %v952, 0.01
        %v955 = vsel %vm953, %v952, %v954
        %956 = vst.msk [vmem:[%s711] sm:$0xff] %vm800, %v955
        %s957 = sand.u32 %s408, 1
        %s958 = scalar_lea.sflag [#allocation4], %s957
        %s959 = sand.u32 %s408, 1
        %s960 = smul.addr %s959, 8
        %s961 = scalar_lea.vmem [#allocation19], %s960
        // Predicated region
        $region125: #{tpu_custom_call.1} parent=83 // pred_check
          %p962 = pneg %p418
        $region126: #{tpu_custom_call.1} parent=83 // pred_check_branch
          %964 = sbr.rel (%p962) target = $region128
        $region127: #{tpu_custom_call.1} parent=83 // pred_region
          %966 = vsyncadd %s958, 0
          %s967 = smul.addr %s40, 2
          %s968 = sadd.s32 %s41, %s967
          %s969 = smul.addr %s968, 8
          %s970 = scalar_lea.hbm %s16, %s969
          %s972 = sshll.u32 %s961, 4
          %s973 = int_to_ptr.vmem [resolvable:$true] %s972
          %s974 = sshll.u32 %s970, 4
          %s975 = int_to_ptr.hbm [resolvable:$true] %s974
          %977 = dma.vmem_to_hbm [thread:$0]  %s973, 128, %s975, %s958
        $region128: #{tpu_custom_call.1} parent=83 // pred_fallthru
          _
      $region84: #{tpu_custom_call.1} parent=5 // pred_fallthru
        _
      %p978 = scmp.le.s32.totalorder 2, %s31
      // Predicated region
      $region129: #{tpu_custom_call.1} parent=5 // pred_check
        %p979 = pneg %p978
      $region130: #{tpu_custom_call.1} parent=5 // pred_check_branch
        %981 = sbr.rel (%p979) target = $region132
      $region131: #{tpu_custom_call.1} parent=5 // pred_region
        %s982 = ssub.s32 %s31, 2
        // Predicated region
        $region133: #{tpu_custom_call.1} parent=131 // pred_check
          %p983 = pneg %p424
        $region134: #{tpu_custom_call.1} parent=131 // pred_check_branch
          %985 = sbr.rel (%p983) target = $region136
        $region135: #{tpu_custom_call.1} parent=131 // pred_region
          %s986 = sand.u32 %s409, 1
          %s987 = scalar_lea.sflag [#allocation4], %s986
          %s988 = sand.u32 %s409, 1
          %s989 = smul.addr %s988, 8
          %s990 = scalar_lea.vmem [#allocation19], %s989
          %992 = dma.done %s987, 128
        $region136: #{tpu_custom_call.1} parent=131 // pred_fallthru
          _
      $region132: #{tpu_custom_call.1} parent=5 // pred_fallthru
        _
    $region6: #{tpu_custom_call.1} parent=1 // loop_footer
      %s35 = sadd.s32 1, %s31
    $region7: #{tpu_custom_call.1} parent=1 // loop_footer_branch
      %30 = sbr.rel target = $region3
    $region8: #{tpu_custom_call.1} parent=1 // loop_exit
      _
    %993 = vsyncpa [#allocation3], 1
    %s994 = scalar_lea.sflag [#allocation3], 1
    %995 = vsyncpa %s994, 1
    %996 = vsyncpa [#allocation6], 1
    %997 = vsyncpa [#allocation9], 1
    %998 = vsyncpa [#allocation12], 1
    %999 = vsyncpa [#allocation15], 1
    %1000 = vsyncpa [#allocation18], 1
    %1001 = vsyncpa [#allocation4], 1
    %s1002 = scalar_lea.sflag [#allocation4], 1
    %1003 = vsyncpa %s1002, 1

</llo_original>
